<compile_context>
chip_gen: v7x
topology: tpu7x:2x2x1
jax: 0.10.0
libtpu: 0.0.40
codegen_flags: <defaults>
</compile_context>

<pallas_src>
from functools import partial

import jax
import jax.numpy as jnp
from jax.experimental import pallas as pl
from jax.experimental.pallas import tpu as pltpu

EPS = 1e-5          # nn.LayerNorm default eps
LANE = 128
MAX_BATCH_TILE = 4096


def _round_up(x, m):
    return (x + m - 1) // m * m


def _cdiv(a, b):
    return -(-a // b)


def _pad2(x, rows, cols):
    return jnp.pad(x, ((0, rows - x.shape[0]), (0, cols - x.shape[1])))


def _critic_kernel(state_ref, action_ref,
                   w1_ref, b1_ref, g1_ref, be1_ref,
                   g2_ref, be2_ref,
                   w2_ref, b2_ref,
                   wa_ref, ba_ref,
                   wq_ref, bq_ref,
                   out_ref, *, f1_dim, f2_dim):
    wd = w1_ref.dtype    # MXU input dtype (bf16 by default)

    def layernorm(x, gamma, beta, true_dim):
        # x is exactly 0 beyond `true_dim` lanes and gamma/beta are zero-padded, so
        # plain sums divided by the TRUE feature count give the exact unpadded
        # LayerNorm (biased variance, eps=1e-5) and padded lanes remain 0.
        # Single-pass E[x^2]-E[x]^2 in f32 is fine for post-linear activations.
        inv_n = 1.0 / true_dim
        mu = jnp.sum(x, axis=-1, keepdims=True) * inv_n
        ex2 = jnp.sum(x * x, axis=-1, keepdims=True) * inv_n
        var = jnp.maximum(ex2 - mu * mu, 0.0)
        return (x - mu) * jax.lax.rsqrt(var + EPS) * gamma + beta

    # state_value = fc1(state)      (state streamed f32, cast to bf16 on-chip)
    h = jnp.dot(state_ref[...].astype(wd), w1_ref[...],
                preferred_element_type=jnp.float32) + b1_ref[...]
    # state_value = bn1(state_value); relu
    h = layernorm(h, g1_ref[...], be1_ref[...], f1_dim)
    h = jnp.maximum(h, 0.0)
    # state_value = bn2(state_value)   (applied BEFORE fc2, exactly as in the reference)
    h = layernorm(h, g2_ref[...], be2_ref[...], f2_dim)
    # state_value = fc2(state_value)
    sv = jnp.dot(h.astype(wd), w2_ref[...],
                 preferred_element_type=jnp.float32) + b2_ref[...]
    # action_value = relu(action_value(action))
    av = jnp.dot(action_ref[...].astype(wd), wa_ref[...],
                 preferred_element_type=jnp.float32) + ba_ref[...]
    av = jnp.maximum(av, 0.0)
    # state_action_value = relu(state_value + action_value); q(...)
    x = jnp.maximum(sv + av, 0.0)
    q = jnp.dot(x.astype(wd), wq_ref[...],
                preferred_element_type=jnp.float32) + bq_ref[...]
    # Narrow (TB, 1) store: last dim == full output array dim, so this is legal and
    # removes ~512 B/row of lane-padded writeback.
    out_ref[...] = q[:, :1].astype(out_ref.dtype)


def _tpu_vmem_capacity_bytes():
    """Per-core VMEM capacity; conservative 64 MiB (v7x) fallback if unavailable."""
    try:
        info = pltpu.get_tpu_info()
        cap = int(getattr(info, "vmem_capacity_bytes", 0))
        if cap > 0:
            return cap
    except Exception:
        pass
    return 64 << 20


def _choose_batch_tile(B, stream_row_bytes, act_row_bytes, resident_bytes,
                       vmem_budget_bytes):
    """Pick the batch-tile row count.

    As large as the VMEM budget allows (amortizes the ~0.35 us per-grid-step
    overhead), capped at MAX_BATCH_TILE, but split into >=2 tiles when the batch is
    big enough so dimension_semantics=("parallel",) can feed both v7x TensorCores.
    Accounts for double-buffered streamed IO, f32 intermediate activation slabs, and
    (conservatively double-buffered) VMEM-resident weights.
    """
    per_row = 2 * stream_row_bytes + act_row_bytes
    avail = max(vmem_budget_bytes - 2 * resident_bytes, per_row * 8)
    tb_cap = max(8, min(MAX_BATCH_TILE, (avail // per_row) // 8 * 8))
    b8 = _round_up(B, 8)
    n_steps = max(_cdiv(b8, tb_cap), 2 if b8 >= 16 else 1)
    return int(min(tb_cap, _round_up(_cdiv(b8, n_steps), 8)))


def critic_forward(state, action, params, *, compute_dtype=jnp.bfloat16):
    """state: [B, D] f32; action: [B, n_actions] f32; params: (in, out)-layout weights."""
    B, D = state.shape
    NA = action.shape[1]
    F1 = params["w1"].shape[1]
    F2 = params["w2"].shape[1]
    if F1 != F2:
        # bn2 = LayerNorm(fc2_dims) is applied before fc2 in the reference forward,
        # which only type-checks when fc1_dims == fc2_dims.
        raise ValueError("CriticNetwork.forward requires fc1_dims == fc2_dims")

    F1p = _round_up(F1, LANE)
    F2p = _round_up(F2, LANE)
    OUTp = LANE    # q-head matmul stays lane-dense in VMEM; only column 0 is stored

    wd = compute_dtype
    # Weights: (in, out) layout. Output (lane) dims zero-padded to 128 so intermediate
    # activations stay lane-dense; contraction dims are NOT padded (MXU handles K<128).
    # NOTE: gamma is padded with ZEROS (not ones) so padded lanes stay exactly 0.
    w1 = _pad2(params["w1"], D, F1p).astype(wd)
    b1 = _pad2(params["b1"], 1, F1p)
    g1 = _pad2(params["g1"], 1, F1p)
    be1 = _pad2(params["be1"], 1, F1p)
    g2 = _pad2(params["g2"], 1, F2p)
    be2 = _pad2(params["be2"], 1, F2p)
    w2 = _pad2(params["w2"], F1p, F2p).astype(wd)
    b2 = _pad2(params["b2"], 1, F2p)
    wa = _pad2(params["wa"], NA, F2p).astype(wd)
    ba = _pad2(params["ba"], 1, F2p)
    wq = _pad2(params["wq"], F2p, OUTp).astype(wd)
    bq = _pad2(params["bq"], 1, OUTp)

    weights = (w1, b1, g1, be1, g2, be2, w2, b2, wa, ba, wq, bq)

    w_itemsize = jnp.dtype(wd).itemsize
    resident_bytes = ((w1.size + w2.size + wa.size + wq.size) * w_itemsize
                      + (b1.size + g1.size + be1.size + g2.size + be2.size
                         + b2.size + ba.size + bq.size) * 4)

    vmem_cap = _tpu_vmem_capacity_bytes()
    # Streamed bytes per batch row: f32 state + f32 action in, (TB, 1) f32 out.
    stream_row_bytes = (D + NA + 1) * 4
    # f32 intermediate activation slabs (h, sv, av, x, q, temps) also live in VMEM.
    act_row_bytes = 6 * max(F1p, F2p, OUTp) * 4

    TB = _choose_batch_tile(B, stream_row_bytes, act_row_bytes, resident_bytes,
                            vmem_budget_bytes=int(vmem_cap * 0.7))
    Bp = _round_up(B, TB)

    # Inputs go to the kernel unpadded in the feature dim and in their original f32
    # dtype (cast to bf16 on-chip) -> no padding/cast pre-pass over HBM. Only the
    # batch dim is (minimally) padded, and only when needed.
    if Bp != B:
        state_in = jnp.pad(state, ((0, Bp - B), (0, 0)))
        action_in = jnp.pad(action, ((0, Bp - B), (0, 0)))
    else:
        state_in, action_in = state, action

    per_step = TB * (2 * stream_row_bytes + act_row_bytes)
    vmem_limit = int(min(max(2 * resident_bytes + per_step + (4 << 20), 16 << 20),
                         int(vmem_cap * 0.85)))   # generation-aware cap (<=64 MiB v7x)

    kernel = partial(_critic_kernel, f1_dim=float(F1), f2_dim=float(F2))

    # TODO(synk): optionally sweep pipeline_mode=pl.Buffered(3) on these streaming
    # specs; expected only a few-% win, so left at the default double-buffering.
    def row_spec(cols):
        return pl.BlockSpec((TB, cols), lambda i: (i, 0))

    def weight_spec(arr, single_buffer):
        if single_buffer:
            # Constant index_map -> weight stays VMEM-resident; Buffered(1) drops the
            # redundant second buffer (halves resident footprint; matters on v7x).
            return pl.BlockSpec(arr.shape, lambda i: (0, 0),
                                pipeline_mode=pl.Buffered(1))
        return pl.BlockSpec(arr.shape, lambda i: (0, 0))

    def run(single_buffer_weights):
        call = pl.pallas_call(
            kernel,
            out_shape=jax.ShapeDtypeStruct((Bp, 1), jnp.float32),
            grid_spec=pltpu.PrefetchScalarGridSpec(
                num_scalar_prefetch=0,
                grid=(Bp // TB,),
                in_specs=[row_spec(D), row_spec(NA)]
                         + [weight_spec(w, single_buffer_weights) for w in weights],
                out_specs=pl.BlockSpec((TB, 1), lambda i: (i, 0)),
            ),
            compiler_params=pltpu.CompilerParams(
                dimension_semantics=("parallel",),   # batch axis -> both TCs on v7x
                vmem_limit_bytes=vmem_limit,
            ),
        )
        return call(state_in, action_in, *weights)

    try:
        out = jax.block_until_ready(run(True))
    except Exception:
        # pipeline_mode / pl.Buffered may be unavailable on some jax versions; the
        # default double-buffered resident weights are still correct (just more VMEM).
        out = run(False)

    return out[:B]


def init_params(key, input_dim, fc1_dims, fc2_dims, n_actions):
    """Deterministic init mirroring CriticNetwork.__init__ (weights stored as (in, out))."""
    ks = jax.random.split(key, 8)
    f1 = 1.0 / float(fc1_dims) ** 0.5      # fc1.weight.size()[0] == fc1_dims
    f2 = 1.0 / float(fc2_dims) ** 0.5      # fc2.weight.size()[0] == fc2_dims
    fa = 1.0 / float(n_actions) ** 0.5     # action_value: default nn.Linear init range
    f3 = 0.003
    u = lambda k, shp, lim: jax.random.uniform(k, shp, jnp.float32, -lim, lim)
    return {
        "w1": u(ks[0], (input_dim, fc1_dims), f1),
        "b1": u(ks[1], (1, fc1_dims), f1),
        "g1": jnp.ones((1, fc1_dims), jnp.float32),    # bn1 = LayerNorm(fc1_dims)
        "be1": jnp.zeros((1, fc1_dims), jnp.float32),
        "g2": jnp.ones((1, fc2_dims), jnp.float32),    # bn2 = LayerNorm(fc2_dims)
        "be2": jnp.zeros((1, fc2_dims), jnp.float32),
        "w2": u(ks[2], (fc1_dims, fc2_dims), f2),
        "b2": u(ks[3], (1, fc2_dims), f2),
        "wa": u(ks[4], (n_actions, fc2_dims), fa),     # action_value
        "ba": u(ks[5], (1, fc2_dims), fa),
        "wq": u(ks[6], (fc2_dims, 1), f3),             # q head
        "bq": u(ks[7], (1, 1), f3),
    }


def _layernorm_ref(x, gamma, beta):
    mu = jnp.mean(x, axis=-1, keepdims=True)
    var = jnp.mean((x - mu) ** 2, axis=-1, keepdims=True)
    return (x - mu) * jax.lax.rsqrt(var + EPS) * gamma + beta


def critic_forward_ref(state, action, p, compute_dtype=jnp.float32):
    """Pure-JAX reference reproducing the PyTorch forward semantics."""
    cd = compute_dtype
    dot = lambda x, w: jnp.dot(x.astype(cd), w.astype(cd),
                               preferred_element_type=jnp.float32)
    h = dot(state, p["w1"]) + p["b1"]
    h = _layernorm_ref(h, p["g1"], p["be1"])
    h = jnp.maximum(h, 0.0)
    h = _layernorm_ref(h, p["g2"], p["be2"])        # bn2 before fc2, as in the module
    sv = dot(h, p["w2"]) + p["b2"]
    av = jnp.maximum(dot(action, p["wa"]) + p["ba"], 0.0)
    x = jnp.maximum(sv + av, 0.0)
    return dot(x, p["wq"]) + p["bq"]


if __name__ == "__main__":
    key = jax.random.PRNGKey(0)
    k_s, k_a, k_p = jax.random.split(key, 3)

    # bn2(LayerNorm(fc2_dims)) applied before fc2 forces fc1_dims == fc2_dims.
    B, D, F1, F2, NA = 8, 32, 32, 32, 8
    state = jax.random.normal(k_s, (B, D), jnp.float32)
    action = jax.random.normal(k_a, (B, NA), jnp.float32)
    params = init_params(k_p, D, F1, F2, NA)

    out = critic_forward(state, action, params)
    out = jax.block_until_ready(out)
    assert out.shape == (B, 1)

    # Match the kernel's precision choices (bf16 matmul inputs, f32 accumulation).
    ref_bf16 = critic_forward_ref(state, action, params, compute_dtype=jnp.bfloat16)
    assert jnp.allclose(out, ref_bf16, atol=1e-3, rtol=1e-3), "mismatch vs bf16-matched reference"
    # Semantic check against the full-f32 reference (loose tolerance for bf16 rounding).
    ref_f32 = critic_forward_ref(state, action, params, compute_dtype=jnp.float32)
    assert jnp.allclose(out, ref_f32, atol=2e-2, rtol=2e-2), "mismatch vs f32 reference"

    print("KERNEL_OK")
</pallas_src>

<mosaic_0001>
module attributes {stable_mosaic.version = 11 : i64} {
  func.func @_critic_kernel(%arg0: i32, %arg1: memref<8x32xf32, #tpu.memory_space<vmem>>, %arg2: memref<8x8xf32, #tpu.memory_space<vmem>>, %arg3: memref<32x128xbf16, #tpu.memory_space<vmem>>, %arg4: memref<1x128xf32, #tpu.memory_space<vmem>>, %arg5: memref<1x128xf32, #tpu.memory_space<vmem>>, %arg6: memref<1x128xf32, #tpu.memory_space<vmem>>, %arg7: memref<1x128xf32, #tpu.memory_space<vmem>>, %arg8: memref<1x128xf32, #tpu.memory_space<vmem>>, %arg9: memref<128x128xbf16, #tpu.memory_space<vmem>>, %arg10: memref<1x128xf32, #tpu.memory_space<vmem>>, %arg11: memref<8x128xbf16, #tpu.memory_space<vmem>>, %arg12: memref<1x128xf32, #tpu.memory_space<vmem>>, %arg13: memref<128x128xbf16, #tpu.memory_space<vmem>>, %arg14: memref<1x128xf32, #tpu.memory_space<vmem>>, %arg15: memref<8x1xf32, #tpu.memory_space<vmem>>) attributes {dimension_semantics = [#tpu.dimension_semantics<parallel>], iteration_bounds = array<i64: 1>, scalar_prefetch = 0 : i64, scratch_operands = 0 : i64, tpu.core_type = #tpu.core_type<tc>, window_params = [{transform_indices = @transform_0, window_bounds = array<i64: 8, 32>}, {transform_indices = @transform_1, window_bounds = array<i64: 8, 8>}, {pipeline_mode = #tpu.pipeline_mode<synchronous>, transform_indices = @transform_2, window_bounds = array<i64: 32, 128>}, {pipeline_mode = #tpu.pipeline_mode<synchronous>, transform_indices = @transform_3, window_bounds = array<i64: 1, 128>}, {pipeline_mode = #tpu.pipeline_mode<synchronous>, transform_indices = @transform_4, window_bounds = array<i64: 1, 128>}, {pipeline_mode = #tpu.pipeline_mode<synchronous>, transform_indices = @transform_5, window_bounds = array<i64: 1, 128>}, {pipeline_mode = #tpu.pipeline_mode<synchronous>, transform_indices = @transform_6, window_bounds = array<i64: 1, 128>}, {pipeline_mode = #tpu.pipeline_mode<synchronous>, transform_indices = @transform_7, window_bounds = array<i64: 1, 128>}, {pipeline_mode = #tpu.pipeline_mode<synchronous>, transform_indices = @transform_8, window_bounds = array<i64: 128, 128>}, {pipeline_mode = #tpu.pipeline_mode<synchronous>, transform_indices = @transform_9, window_bounds = array<i64: 1, 128>}, {pipeline_mode = #tpu.pipeline_mode<synchronous>, transform_indices = @transform_10, window_bounds = array<i64: 8, 128>}, {pipeline_mode = #tpu.pipeline_mode<synchronous>, transform_indices = @transform_11, window_bounds = array<i64: 1, 128>}, {pipeline_mode = #tpu.pipeline_mode<synchronous>, transform_indices = @transform_12, window_bounds = array<i64: 128, 128>}, {pipeline_mode = #tpu.pipeline_mode<synchronous>, transform_indices = @transform_13, window_bounds = array<i64: 1, 128>}, {transform_indices = @transform_14, window_bounds = array<i64: 8, 1>}]} {
    %c0 = arith.constant 0 : index
    %c0_0 = arith.constant 0 : index
    %0 = vector.load %arg1[%c0, %c0_0] : memref<8x32xf32, #tpu.memory_space<vmem>>, vector<8x32xf32>
    %1 = arith.truncf %0 : vector<8x32xf32> to vector<8x32xbf16>
    %c0_1 = arith.constant 0 : index
    %c0_2 = arith.constant 0 : index
    %2 = vector.load %arg3[%c0_1, %c0_2] : memref<32x128xbf16, #tpu.memory_space<vmem>>, vector<32x128xbf16>
    %cst = arith.constant dense<0.000000e+00> : vector<8x128xf32>
    %3 = tpu.matmul %1, %2, %cst {dimension_numbers = #tpu.dot_dimension_numbers<[1], [0], [0], [1], [0, 0, 1, 1], [], []>} : vector<8x32xbf16>, vector<32x128xbf16>, vector<8x128xf32> -> vector<8x128xf32>
    %c0_3 = arith.constant 0 : index
    %c0_4 = arith.constant 0 : index
    %4 = vector.load %arg4[%c0_3, %c0_4] : memref<1x128xf32, #tpu.memory_space<vmem>>, vector<1x128xf32>
    %5 = vector.broadcast %4 : vector<1x128xf32> to vector<8x128xf32>
    %6 = arith.addf %3, %5 : vector<8x128xf32>
    %c0_5 = arith.constant 0 : index
    %c0_6 = arith.constant 0 : index
    %7 = vector.load %arg5[%c0_5, %c0_6] : memref<1x128xf32, #tpu.memory_space<vmem>>, vector<1x128xf32>
    %c0_7 = arith.constant 0 : index
    %c0_8 = arith.constant 0 : index
    %8 = vector.load %arg6[%c0_7, %c0_8] : memref<1x128xf32, #tpu.memory_space<vmem>>, vector<1x128xf32>
    %cst_9 = arith.constant dense<0.000000e+00> : vector<8xf32>
    %9 = vector.multi_reduction <add>, %6, %cst_9 [1] : vector<8x128xf32> to vector<8xf32>
    %10 = vector.shape_cast %9 : vector<8xf32> to vector<8x1xf32>
    %cst_10 = arith.constant 3.125000e-02 : f32
    %11 = vector.broadcast %cst_10 : f32 to vector<8x1xf32>
    %12 = arith.mulf %10, %11 : vector<8x1xf32>
    %13 = arith.mulf %6, %6 : vector<8x128xf32>
    %cst_11 = arith.constant dense<0.000000e+00> : vector<8xf32>
    %14 = vector.multi_reduction <add>, %13, %cst_11 [1] : vector<8x128xf32> to vector<8xf32>
    %15 = vector.shape_cast %14 : vector<8xf32> to vector<8x1xf32>
    %cst_12 = arith.constant 3.125000e-02 : f32
    %16 = vector.broadcast %cst_12 : f32 to vector<8x1xf32>
    %17 = arith.mulf %15, %16 : vector<8x1xf32>
    %18 = arith.mulf %12, %12 : vector<8x1xf32>
    %19 = arith.subf %17, %18 : vector<8x1xf32>
    %cst_13 = arith.constant 0.000000e+00 : f32
    %20 = vector.broadcast %cst_13 : f32 to vector<8x1xf32>
    %21 = arith.maximumf %19, %20 : vector<8x1xf32>
    %22 = vector.broadcast %12 : vector<8x1xf32> to vector<8x128xf32>
    %23 = arith.subf %6, %22 : vector<8x128xf32>
    %cst_14 = arith.constant 9.99999974E-6 : f32
    %24 = vector.broadcast %cst_14 : f32 to vector<8x1xf32>
    %25 = arith.addf %21, %24 : vector<8x1xf32>
    %26 = math.rsqrt %25 : vector<8x1xf32>
    %27 = vector.broadcast %26 : vector<8x1xf32> to vector<8x128xf32>
    %28 = arith.mulf %23, %27 : vector<8x128xf32>
    %29 = vector.broadcast %7 : vector<1x128xf32> to vector<8x128xf32>
    %30 = arith.mulf %28, %29 : vector<8x128xf32>
    %31 = vector.broadcast %8 : vector<1x128xf32> to vector<8x128xf32>
    %32 = arith.addf %30, %31 : vector<8x128xf32>
    %cst_15 = arith.constant 0.000000e+00 : f32
    %33 = vector.broadcast %cst_15 : f32 to vector<8x128xf32>
    %34 = arith.maximumf %32, %33 : vector<8x128xf32>
    %c0_16 = arith.constant 0 : index
    %c0_17 = arith.constant 0 : index
    %35 = vector.load %arg7[%c0_16, %c0_17] : memref<1x128xf32, #tpu.memory_space<vmem>>, vector<1x128xf32>
    %c0_18 = arith.constant 0 : index
    %c0_19 = arith.constant 0 : index
    %36 = vector.load %arg8[%c0_18, %c0_19] : memref<1x128xf32, #tpu.memory_space<vmem>>, vector<1x128xf32>
    %cst_20 = arith.constant dense<0.000000e+00> : vector<8xf32>
    %37 = vector.multi_reduction <add>, %34, %cst_20 [1] : vector<8x128xf32> to vector<8xf32>
    %38 = vector.shape_cast %37 : vector<8xf32> to vector<8x1xf32>
    %cst_21 = arith.constant 3.125000e-02 : f32
    %39 = vector.broadcast %cst_21 : f32 to vector<8x1xf32>
    %40 = arith.mulf %38, %39 : vector<8x1xf32>
    %41 = arith.mulf %34, %34 : vector<8x128xf32>
    %cst_22 = arith.constant dense<0.000000e+00> : vector<8xf32>
    %42 = vector.multi_reduction <add>, %41, %cst_22 [1] : vector<8x128xf32> to vector<8xf32>
    %43 = vector.shape_cast %42 : vector<8xf32> to vector<8x1xf32>
    %cst_23 = arith.constant 3.125000e-02 : f32
    %44 = vector.broadcast %cst_23 : f32 to vector<8x1xf32>
    %45 = arith.mulf %43, %44 : vector<8x1xf32>
    %46 = arith.mulf %40, %40 : vector<8x1xf32>
    %47 = arith.subf %45, %46 : vector<8x1xf32>
    %cst_24 = arith.constant 0.000000e+00 : f32
    %48 = vector.broadcast %cst_24 : f32 to vector<8x1xf32>
    %49 = arith.maximumf %47, %48 : vector<8x1xf32>
    %50 = vector.broadcast %40 : vector<8x1xf32> to vector<8x128xf32>
    %51 = arith.subf %34, %50 : vector<8x128xf32>
    %cst_25 = arith.constant 9.99999974E-6 : f32
    %52 = vector.broadcast %cst_25 : f32 to vector<8x1xf32>
    %53 = arith.addf %49, %52 : vector<8x1xf32>
    %54 = math.rsqrt %53 : vector<8x1xf32>
    %55 = vector.broadcast %54 : vector<8x1xf32> to vector<8x128xf32>
    %56 = arith.mulf %51, %55 : vector<8x128xf32>
    %57 = vector.broadcast %35 : vector<1x128xf32> to vector<8x128xf32>
    %58 = arith.mulf %56, %57 : vector<8x128xf32>
    %59 = vector.broadcast %36 : vector<1x128xf32> to vector<8x128xf32>
    %60 = arith.addf %58, %59 : vector<8x128xf32>
    %61 = arith.truncf %60 : vector<8x128xf32> to vector<8x128xbf16>
    %c0_26 = arith.constant 0 : index
    %c0_27 = arith.constant 0 : index
    %62 = vector.load %arg9[%c0_26, %c0_27] : memref<128x128xbf16, #tpu.memory_space<vmem>>, vector<128x128xbf16>
    %cst_28 = arith.constant dense<0.000000e+00> : vector<8x128xf32>
    %63 = tpu.matmul %61, %62, %cst_28 {dimension_numbers = #tpu.dot_dimension_numbers<[1], [0], [0], [1], [0, 0, 1, 1], [], []>} : vector<8x128xbf16>, vector<128x128xbf16>, vector<8x128xf32> -> vector<8x128xf32>
    %c0_29 = arith.constant 0 : index
    %c0_30 = arith.constant 0 : index
    %64 = vector.load %arg10[%c0_29, %c0_30] : memref<1x128xf32, #tpu.memory_space<vmem>>, vector<1x128xf32>
    %65 = vector.broadcast %64 : vector<1x128xf32> to vector<8x128xf32>
    %66 = arith.addf %63, %65 : vector<8x128xf32>
    %c0_31 = arith.constant 0 : index
    %c0_32 = arith.constant 0 : index
    %67 = vector.load %arg2[%c0_31, %c0_32] : memref<8x8xf32, #tpu.memory_space<vmem>>, vector<8x8xf32>
    %68 = arith.truncf %67 : vector<8x8xf32> to vector<8x8xbf16>
    %c0_33 = arith.constant 0 : index
    %c0_34 = arith.constant 0 : index
    %69 = vector.load %arg11[%c0_33, %c0_34] : memref<8x128xbf16, #tpu.memory_space<vmem>>, vector<8x128xbf16>
    %cst_35 = arith.constant dense<0.000000e+00> : vector<8x128xf32>
    %70 = tpu.matmul %68, %69, %cst_35 {dimension_numbers = #tpu.dot_dimension_numbers<[1], [0], [0], [1], [0, 0, 1, 1], [], []>} : vector<8x8xbf16>, vector<8x128xbf16>, vector<8x128xf32> -> vector<8x128xf32>
    %c0_36 = arith.constant 0 : index
    %c0_37 = arith.constant 0 : index
    %71 = vector.load %arg12[%c0_36, %c0_37] : memref<1x128xf32, #tpu.memory_space<vmem>>, vector<1x128xf32>
    %72 = vector.broadcast %71 : vector<1x128xf32> to vector<8x128xf32>
    %73 = arith.addf %70, %72 : vector<8x128xf32>
    %cst_38 = arith.constant 0.000000e+00 : f32
    %74 = vector.broadcast %cst_38 : f32 to vector<8x128xf32>
    %75 = arith.maximumf %73, %74 : vector<8x128xf32>
    %76 = arith.addf %66, %75 : vector<8x128xf32>
    %cst_39 = arith.constant 0.000000e+00 : f32
    %77 = vector.broadcast %cst_39 : f32 to vector<8x128xf32>
    %78 = arith.maximumf %76, %77 : vector<8x128xf32>
    %79 = arith.truncf %78 : vector<8x128xf32> to vector<8x128xbf16>
    %c0_40 = arith.constant 0 : index
    %c0_41 = arith.constant 0 : index
    %80 = vector.load %arg13[%c0_40, %c0_41] : memref<128x128xbf16, #tpu.memory_space<vmem>>, vector<128x128xbf16>
    %cst_42 = arith.constant dense<0.000000e+00> : vector<8x128xf32>
    %81 = tpu.matmul %79, %80, %cst_42 {dimension_numbers = #tpu.dot_dimension_numbers<[1], [0], [0], [1], [0, 0, 1, 1], [], []>} : vector<8x128xbf16>, vector<128x128xbf16>, vector<8x128xf32> -> vector<8x128xf32>
    %c0_43 = arith.constant 0 : index
    %c0_44 = arith.constant 0 : index
    %82 = vector.load %arg14[%c0_43, %c0_44] : memref<1x128xf32, #tpu.memory_space<vmem>>, vector<1x128xf32>
    %83 = vector.broadcast %82 : vector<1x128xf32> to vector<8x128xf32>
    %84 = arith.addf %81, %83 : vector<8x128xf32>
    %85 = vector.extract_strided_slice %84 {offsets = [0, 0], sizes = [8, 1], strides = [1, 1]} : vector<8x128xf32> to vector<8x1xf32>
    %c0_45 = arith.constant 0 : index
    %c0_46 = arith.constant 0 : index
    %86 = vector.load %arg15[%c0_45, %c0_46] : memref<8x1xf32, #tpu.memory_space<vmem>>, vector<8x1xf32>
    tpu.vector_store %arg15[%c0_45, %c0_46], %85 {strides = array<i32>} : memref<8x1xf32, #tpu.memory_space<vmem>>, vector<8x1xf32>,
    return
  }
  func.func @transform_0(%arg0: i32) -> (i32, i32) {
    %c0_i32 = arith.constant 0 : i32
    %c0_i32_0 = arith.constant 0 : i32
    return %arg0, %c0_i32 : i32, i32
  }
  func.func @transform_1(%arg0: i32) -> (i32, i32) {
    %c0_i32 = arith.constant 0 : i32
    %c0_i32_0 = arith.constant 0 : i32
    return %arg0, %c0_i32 : i32, i32
  }
  func.func @transform_2(%arg0: i32) -> (i32, i32) {
    %c0_i32 = arith.constant 0 : i32
    %c0_i32_0 = arith.constant 0 : i32
    %c0_i32_1 = arith.constant 0 : i32
    return %c0_i32, %c0_i32_0 : i32, i32
  }
  func.func @transform_3(%arg0: i32) -> (i32, i32) {
    %c0_i32 = arith.constant 0 : i32
    %c0_i32_0 = arith.constant 0 : i32
    %c0_i32_1 = arith.constant 0 : i32
    return %c0_i32, %c0_i32_0 : i32, i32
  }
  func.func @transform_4(%arg0: i32) -> (i32, i32) {
    %c0_i32 = arith.constant 0 : i32
    %c0_i32_0 = arith.constant 0 : i32
    %c0_i32_1 = arith.constant 0 : i32
    return %c0_i32, %c0_i32_0 : i32, i32
  }
  func.func @transform_5(%arg0: i32) -> (i32, i32) {
    %c0_i32 = arith.constant 0 : i32
    %c0_i32_0 = arith.constant 0 : i32
    %c0_i32_1 = arith.constant 0 : i32
    return %c0_i32, %c0_i32_0 : i32, i32
  }
  func.func @transform_6(%arg0: i32) -> (i32, i32) {
    %c0_i32 = arith.constant 0 : i32
    %c0_i32_0 = arith.constant 0 : i32
    %c0_i32_1 = arith.constant 0 : i32
    return %c0_i32, %c0_i32_0 : i32, i32
  }
  func.func @transform_7(%arg0: i32) -> (i32, i32) {
    %c0_i32 = arith.constant 0 : i32
    %c0_i32_0 = arith.constant 0 : i32
    %c0_i32_1 = arith.constant 0 : i32
    return %c0_i32, %c0_i32_0 : i32, i32
  }
  func.func @transform_8(%arg0: i32) -> (i32, i32) {
    %c0_i32 = arith.constant 0 : i32
    %c0_i32_0 = arith.constant 0 : i32
    %c0_i32_1 = arith.constant 0 : i32
    return %c0_i32, %c0_i32_0 : i32, i32
  }
  func.func @transform_9(%arg0: i32) -> (i32, i32) {
    %c0_i32 = arith.constant 0 : i32
    %c0_i32_0 = arith.constant 0 : i32
    %c0_i32_1 = arith.constant 0 : i32
    return %c0_i32, %c0_i32_0 : i32, i32
  }
  func.func @transform_10(%arg0: i32) -> (i32, i32) {
    %c0_i32 = arith.constant 0 : i32
    %c0_i32_0 = arith.constant 0 : i32
    %c0_i32_1 = arith.constant 0 : i32
    return %c0_i32, %c0_i32_0 : i32, i32
  }
  func.func @transform_11(%arg0: i32) -> (i32, i32) {
    %c0_i32 = arith.constant 0 : i32
    %c0_i32_0 = arith.constant 0 : i32
    %c0_i32_1 = arith.constant 0 : i32
    return %c0_i32, %c0_i32_0 : i32, i32
  }
  func.func @transform_12(%arg0: i32) -> (i32, i32) {
    %c0_i32 = arith.constant 0 : i32
    %c0_i32_0 = arith.constant 0 : i32
    %c0_i32_1 = arith.constant 0 : i32
    return %c0_i32, %c0_i32_0 : i32, i32
  }
  func.func @transform_13(%arg0: i32) -> (i32, i32) {
    %c0_i32 = arith.constant 0 : i32
    %c0_i32_0 = arith.constant 0 : i32
    %c0_i32_1 = arith.constant 0 : i32
    return %c0_i32, %c0_i32_0 : i32, i32
  }
  func.func @transform_14(%arg0: i32) -> (i32, i32) {
    %c0_i32 = arith.constant 0 : i32
    %c0_i32_0 = arith.constant 0 : i32
    return %arg0, %c0_i32 : i32, i32
  }
}

module attributes {stable_mosaic.version = 11 : i64} {
  func.func @_critic_kernel(%arg0: i32, %arg1: memref<8x32xf32, #tpu.memory_space<vmem>>, %arg2: memref<8x8xf32, #tpu.memory_space<vmem>>, %arg3: memref<32x128xbf16, #tpu.memory_space<vmem>>, %arg4: memref<1x128xf32, #tpu.memory_space<vmem>>, %arg5: memref<1x128xf32, #tpu.memory_space<vmem>>, %arg6: memref<1x128xf32, #tpu.memory_space<vmem>>, %arg7: memref<1x128xf32, #tpu.memory_space<vmem>>, %arg8: memref<1x128xf32, #tpu.memory_space<vmem>>, %arg9: memref<128x128xbf16, #tpu.memory_space<vmem>>, %arg10: memref<1x128xf32, #tpu.memory_space<vmem>>, %arg11: memref<8x128xbf16, #tpu.memory_space<vmem>>, %arg12: memref<1x128xf32, #tpu.memory_space<vmem>>, %arg13: memref<128x128xbf16, #tpu.memory_space<vmem>>, %arg14: memref<1x128xf32, #tpu.memory_space<vmem>>, %arg15: memref<8x1xf32, #tpu.memory_space<vmem>>) attributes {dimension_semantics = [#tpu.dimension_semantics<parallel>], iteration_bounds = array<i64: 1>, scalar_prefetch = 0 : i64, scratch_operands = 0 : i64, tpu.core_type = #tpu.core_type<tc>, window_params = [{transform_indices = @transform_0, window_bounds = array<i64: 8, 32>}, {transform_indices = @transform_1, window_bounds = array<i64: 8, 8>}, {pipeline_mode = #tpu.pipeline_mode<synchronous>, transform_indices = @transform_2, window_bounds = array<i64: 32, 128>}, {pipeline_mode = #tpu.pipeline_mode<synchronous>, transform_indices = @transform_3, window_bounds = array<i64: 1, 128>}, {pipeline_mode = #tpu.pipeline_mode<synchronous>, transform_indices = @transform_4, window_bounds = array<i64: 1, 128>}, {pipeline_mode = #tpu.pipeline_mode<synchronous>, transform_indices = @transform_5, window_bounds = array<i64: 1, 128>}, {pipeline_mode = #tpu.pipeline_mode<synchronous>, transform_indices = @transform_6, window_bounds = array<i64: 1, 128>}, {pipeline_mode = #tpu.pipeline_mode<synchronous>, transform_indices = @transform_7, window_bounds = array<i64: 1, 128>}, {pipeline_mode = #tpu.pipeline_mode<synchronous>, transform_indices = @transform_8, window_bounds = array<i64: 128, 128>}, {pipeline_mode = #tpu.pipeline_mode<synchronous>, transform_indices = @transform_9, window_bounds = array<i64: 1, 128>}, {pipeline_mode = #tpu.pipeline_mode<synchronous>, transform_indices = @transform_10, window_bounds = array<i64: 8, 128>}, {pipeline_mode = #tpu.pipeline_mode<synchronous>, transform_indices = @transform_11, window_bounds = array<i64: 1, 128>}, {pipeline_mode = #tpu.pipeline_mode<synchronous>, transform_indices = @transform_12, window_bounds = array<i64: 128, 128>}, {pipeline_mode = #tpu.pipeline_mode<synchronous>, transform_indices = @transform_13, window_bounds = array<i64: 1, 128>}, {transform_indices = @transform_14, window_bounds = array<i64: 8, 1>}]} {
    %c0 = arith.constant 0 : index
    %c0_0 = arith.constant 0 : index
    %0 = vector.load %arg1[%c0, %c0_0] : memref<8x32xf32, #tpu.memory_space<vmem>>, vector<8x32xf32>
    %1 = arith.truncf %0 : vector<8x32xf32> to vector<8x32xbf16>
    %c0_1 = arith.constant 0 : index
    %c0_2 = arith.constant 0 : index
    %2 = vector.load %arg3[%c0_1, %c0_2] : memref<32x128xbf16, #tpu.memory_space<vmem>>, vector<32x128xbf16>
    %cst = arith.constant dense<0.000000e+00> : vector<8x128xf32>
    %3 = tpu.matmul %1, %2, %cst {dimension_numbers = #tpu.dot_dimension_numbers<[1], [0], [0], [1], [0, 0, 1, 1], [], []>} : vector<8x32xbf16>, vector<32x128xbf16>, vector<8x128xf32> -> vector<8x128xf32>
    %c0_3 = arith.constant 0 : index
    %c0_4 = arith.constant 0 : index
    %4 = vector.load %arg4[%c0_3, %c0_4] : memref<1x128xf32, #tpu.memory_space<vmem>>, vector<1x128xf32>
    %5 = vector.broadcast %4 : vector<1x128xf32> to vector<8x128xf32>
    %6 = arith.addf %3, %5 : vector<8x128xf32>
    %c0_5 = arith.constant 0 : index
    %c0_6 = arith.constant 0 : index
    %7 = vector.load %arg5[%c0_5, %c0_6] : memref<1x128xf32, #tpu.memory_space<vmem>>, vector<1x128xf32>
    %c0_7 = arith.constant 0 : index
    %c0_8 = arith.constant 0 : index
    %8 = vector.load %arg6[%c0_7, %c0_8] : memref<1x128xf32, #tpu.memory_space<vmem>>, vector<1x128xf32>
    %cst_9 = arith.constant dense<0.000000e+00> : vector<8xf32>
    %9 = vector.multi_reduction <add>, %6, %cst_9 [1] : vector<8x128xf32> to vector<8xf32>
    %10 = vector.shape_cast %9 : vector<8xf32> to vector<8x1xf32>
    %cst_10 = arith.constant 3.125000e-02 : f32
    %11 = vector.broadcast %cst_10 : f32 to vector<8x1xf32>
    %12 = arith.mulf %10, %11 : vector<8x1xf32>
    %13 = arith.mulf %6, %6 : vector<8x128xf32>
    %cst_11 = arith.constant dense<0.000000e+00> : vector<8xf32>
    %14 = vector.multi_reduction <add>, %13, %cst_11 [1] : vector<8x128xf32> to vector<8xf32>
    %15 = vector.shape_cast %14 : vector<8xf32> to vector<8x1xf32>
    %cst_12 = arith.constant 3.125000e-02 : f32
    %16 = vector.broadcast %cst_12 : f32 to vector<8x1xf32>
    %17 = arith.mulf %15, %16 : vector<8x1xf32>
    %18 = arith.mulf %12, %12 : vector<8x1xf32>
    %19 = arith.subf %17, %18 : vector<8x1xf32>
    %cst_13 = arith.constant 0.000000e+00 : f32
    %20 = vector.broadcast %cst_13 : f32 to vector<8x1xf32>
    %21 = arith.maximumf %19, %20 : vector<8x1xf32>
    %22 = vector.broadcast %12 : vector<8x1xf32> to vector<8x128xf32>
    %23 = arith.subf %6, %22 : vector<8x128xf32>
    %cst_14 = arith.constant 9.99999974E-6 : f32
    %24 = vector.broadcast %cst_14 : f32 to vector<8x1xf32>
    %25 = arith.addf %21, %24 : vector<8x1xf32>
    %26 = math.rsqrt %25 : vector<8x1xf32>
    %27 = vector.broadcast %26 : vector<8x1xf32> to vector<8x128xf32>
    %28 = arith.mulf %23, %27 : vector<8x128xf32>
    %29 = vector.broadcast %7 : vector<1x128xf32> to vector<8x128xf32>
    %30 = arith.mulf %28, %29 : vector<8x128xf32>
    %31 = vector.broadcast %8 : vector<1x128xf32> to vector<8x128xf32>
    %32 = arith.addf %30, %31 : vector<8x128xf32>
    %cst_15 = arith.constant 0.000000e+00 : f32
    %33 = vector.broadcast %cst_15 : f32 to vector<8x128xf32>
    %34 = arith.maximumf %32, %33 : vector<8x128xf32>
    %c0_16 = arith.constant 0 : index
    %c0_17 = arith.constant 0 : index
    %35 = vector.load %arg7[%c0_16, %c0_17] : memref<1x128xf32, #tpu.memory_space<vmem>>, vector<1x128xf32>
    %c0_18 = arith.constant 0 : index
    %c0_19 = arith.constant 0 : index
    %36 = vector.load %arg8[%c0_18, %c0_19] : memref<1x128xf32, #tpu.memory_space<vmem>>, vector<1x128xf32>
    %cst_20 = arith.constant dense<0.000000e+00> : vector<8xf32>
    %37 = vector.multi_reduction <add>, %34, %cst_20 [1] : vector<8x128xf32> to vector<8xf32>
    %38 = vector.shape_cast %37 : vector<8xf32> to vector<8x1xf32>
    %cst_21 = arith.constant 3.125000e-02 : f32
    %39 = vector.broadcast %cst_21 : f32 to vector<8x1xf32>
    %40 = arith.mulf %38, %39 : vector<8x1xf32>
    %41 = arith.mulf %34, %34 : vector<8x128xf32>
    %cst_22 = arith.constant dense<0.000000e+00> : vector<8xf32>
    %42 = vector.multi_reduction <add>, %41, %cst_22 [1] : vector<8x128xf32> to vector<8xf32>
    %43 = vector.shape_cast %42 : vector<8xf32> to vector<8x1xf32>
    %cst_23 = arith.constant 3.125000e-02 : f32
    %44 = vector.broadcast %cst_23 : f32 to vector<8x1xf32>
    %45 = arith.mulf %43, %44 : vector<8x1xf32>
    %46 = arith.mulf %40, %40 : vector<8x1xf32>
    %47 = arith.subf %45, %46 : vector<8x1xf32>
    %cst_24 = arith.constant 0.000000e+00 : f32
    %48 = vector.broadcast %cst_24 : f32 to vector<8x1xf32>
    %49 = arith.maximumf %47, %48 : vector<8x1xf32>
    %50 = vector.broadcast %40 : vector<8x1xf32> to vector<8x128xf32>
    %51 = arith.subf %34, %50 : vector<8x128xf32>
    %cst_25 = arith.constant 9.99999974E-6 : f32
    %52 = vector.broadcast %cst_25 : f32 to vector<8x1xf32>
    %53 = arith.addf %49, %52 : vector<8x1xf32>
    %54 = math.rsqrt %53 : vector<8x1xf32>
    %55 = vector.broadcast %54 : vector<8x1xf32> to vector<8x128xf32>
    %56 = arith.mulf %51, %55 : vector<8x128xf32>
    %57 = vector.broadcast %35 : vector<1x128xf32> to vector<8x128xf32>
    %58 = arith.mulf %56, %57 : vector<8x128xf32>
    %59 = vector.broadcast %36 : vector<1x128xf32> to vector<8x128xf32>
    %60 = arith.addf %58, %59 : vector<8x128xf32>
    %61 = arith.truncf %60 : vector<8x128xf32> to vector<8x128xbf16>
    %c0_26 = arith.constant 0 : index
    %c0_27 = arith.constant 0 : index
    %62 = vector.load %arg9[%c0_26, %c0_27] : memref<128x128xbf16, #tpu.memory_space<vmem>>, vector<128x128xbf16>
    %cst_28 = arith.constant dense<0.000000e+00> : vector<8x128xf32>
    %63 = tpu.matmul %61, %62, %cst_28 {dimension_numbers = #tpu.dot_dimension_numbers<[1], [0], [0], [1], [0, 0, 1, 1], [], []>} : vector<8x128xbf16>, vector<128x128xbf16>, vector<8x128xf32> -> vector<8x128xf32>
    %c0_29 = arith.constant 0 : index
    %c0_30 = arith.constant 0 : index
    %64 = vector.load %arg10[%c0_29, %c0_30] : memref<1x128xf32, #tpu.memory_space<vmem>>, vector<1x128xf32>
    %65 = vector.broadcast %64 : vector<1x128xf32> to vector<8x128xf32>
    %66 = arith.addf %63, %65 : vector<8x128xf32>
    %c0_31 = arith.constant 0 : index
    %c0_32 = arith.constant 0 : index
    %67 = vector.load %arg2[%c0_31, %c0_32] : memref<8x8xf32, #tpu.memory_space<vmem>>, vector<8x8xf32>
    %68 = arith.truncf %67 : vector<8x8xf32> to vector<8x8xbf16>
    %c0_33 = arith.constant 0 : index
    %c0_34 = arith.constant 0 : index
    %69 = vector.load %arg11[%c0_33, %c0_34] : memref<8x128xbf16, #tpu.memory_space<vmem>>, vector<8x128xbf16>
    %cst_35 = arith.constant dense<0.000000e+00> : vector<8x128xf32>
    %70 = tpu.matmul %68, %69, %cst_35 {dimension_numbers = #tpu.dot_dimension_numbers<[1], [0], [0], [1], [0, 0, 1, 1], [], []>} : vector<8x8xbf16>, vector<8x128xbf16>, vector<8x128xf32> -> vector<8x128xf32>
    %c0_36 = arith.constant 0 : index
    %c0_37 = arith.constant 0 : index
    %71 = vector.load %arg12[%c0_36, %c0_37] : memref<1x128xf32, #tpu.memory_space<vmem>>, vector<1x128xf32>
    %72 = vector.broadcast %71 : vector<1x128xf32> to vector<8x128xf32>
    %73 = arith.addf %70, %72 : vector<8x128xf32>
    %cst_38 = arith.constant 0.000000e+00 : f32
    %74 = vector.broadcast %cst_38 : f32 to vector<8x128xf32>
    %75 = arith.maximumf %73, %74 : vector<8x128xf32>
    %76 = arith.addf %66, %75 : vector<8x128xf32>
    %cst_39 = arith.constant 0.000000e+00 : f32
    %77 = vector.broadcast %cst_39 : f32 to vector<8x128xf32>
    %78 = arith.maximumf %76, %77 : vector<8x128xf32>
    %79 = arith.truncf %78 : vector<8x128xf32> to vector<8x128xbf16>
    %c0_40 = arith.constant 0 : index
    %c0_41 = arith.constant 0 : index
    %80 = vector.load %arg13[%c0_40, %c0_41] : memref<128x128xbf16, #tpu.memory_space<vmem>>, vector<128x128xbf16>
    %cst_42 = arith.constant dense<0.000000e+00> : vector<8x128xf32>
    %81 = tpu.matmul %79, %80, %cst_42 {dimension_numbers = #tpu.dot_dimension_numbers<[1], [0], [0], [1], [0, 0, 1, 1], [], []>} : vector<8x128xbf16>, vector<128x128xbf16>, vector<8x128xf32> -> vector<8x128xf32>
    %c0_43 = arith.constant 0 : index
    %c0_44 = arith.constant 0 : index
    %82 = vector.load %arg14[%c0_43, %c0_44] : memref<1x128xf32, #tpu.memory_space<vmem>>, vector<1x128xf32>
    %83 = vector.broadcast %82 : vector<1x128xf32> to vector<8x128xf32>
    %84 = arith.addf %81, %83 : vector<8x128xf32>
    %85 = vector.extract_strided_slice %84 {offsets = [0, 0], sizes = [8, 1], strides = [1, 1]} : vector<8x128xf32> to vector<8x1xf32>
    %c0_45 = arith.constant 0 : index
    %c0_46 = arith.constant 0 : index
    %86 = vector.load %arg15[%c0_45, %c0_46] : memref<8x1xf32, #tpu.memory_space<vmem>>, vector<8x1xf32>
    tpu.vector_store %arg15[%c0_45, %c0_46], %85 {strides = array<i32>} : memref<8x1xf32, #tpu.memory_space<vmem>>, vector<8x1xf32>,
    return
  }
  func.func @transform_0(%arg0: i32) -> (i32, i32) {
    %c0_i32 = arith.constant 0 : i32
    %c0_i32_0 = arith.constant 0 : i32
    return %arg0, %c0_i32 : i32, i32
  }
  func.func @transform_1(%arg0: i32) -> (i32, i32) {
    %c0_i32 = arith.constant 0 : i32
    %c0_i32_0 = arith.constant 0 : i32
    return %arg0, %c0_i32 : i32, i32
  }
  func.func @transform_2(%arg0: i32) -> (i32, i32) {
    %c0_i32 = arith.constant 0 : i32
    %c0_i32_0 = arith.constant 0 : i32
    %c0_i32_1 = arith.constant 0 : i32
    return %c0_i32, %c0_i32_0 : i32, i32
  }
  func.func @transform_3(%arg0: i32) -> (i32, i32) {
    %c0_i32 = arith.constant 0 : i32
    %c0_i32_0 = arith.constant 0 : i32
    %c0_i32_1 = arith.constant 0 : i32
    return %c0_i32, %c0_i32_0 : i32, i32
  }
  func.func @transform_4(%arg0: i32) -> (i32, i32) {
    %c0_i32 = arith.constant 0 : i32
    %c0_i32_0 = arith.constant 0 : i32
    %c0_i32_1 = arith.constant 0 : i32
    return %c0_i32, %c0_i32_0 : i32, i32
  }
  func.func @transform_5(%arg0: i32) -> (i32, i32) {
    %c0_i32 = arith.constant 0 : i32
    %c0_i32_0 = arith.constant 0 : i32
    %c0_i32_1 = arith.constant 0 : i32
    return %c0_i32, %c0_i32_0 : i32, i32
  }
  func.func @transform_6(%arg0: i32) -> (i32, i32) {
    %c0_i32 = arith.constant 0 : i32
    %c0_i32_0 = arith.constant 0 : i32
    %c0_i32_1 = arith.constant 0 : i32
    return %c0_i32, %c0_i32_0 : i32, i32
  }
  func.func @transform_7(%arg0: i32) -> (i32, i32) {
    %c0_i32 = arith.constant 0 : i32
    %c0_i32_0 = arith.constant 0 : i32
    %c0_i32_1 = arith.constant 0 : i32
    return %c0_i32, %c0_i32_0 : i32, i32
  }
  func.func @transform_8(%arg0: i32) -> (i32, i32) {
    %c0_i32 = arith.constant 0 : i32
    %c0_i32_0 = arith.constant 0 : i32
    %c0_i32_1 = arith.constant 0 : i32
    return %c0_i32, %c0_i32_0 : i32, i32
  }
  func.func @transform_9(%arg0: i32) -> (i32, i32) {
    %c0_i32 = arith.constant 0 : i32
    %c0_i32_0 = arith.constant 0 : i32
    %c0_i32_1 = arith.constant 0 : i32
    return %c0_i32, %c0_i32_0 : i32, i32
  }
  func.func @transform_10(%arg0: i32) -> (i32, i32) {
    %c0_i32 = arith.constant 0 : i32
    %c0_i32_0 = arith.constant 0 : i32
    %c0_i32_1 = arith.constant 0 : i32
    return %c0_i32, %c0_i32_0 : i32, i32
  }
  func.func @transform_11(%arg0: i32) -> (i32, i32) {
    %c0_i32 = arith.constant 0 : i32
    %c0_i32_0 = arith.constant 0 : i32
    %c0_i32_1 = arith.constant 0 : i32
    return %c0_i32, %c0_i32_0 : i32, i32
  }
  func.func @transform_12(%arg0: i32) -> (i32, i32) {
    %c0_i32 = arith.constant 0 : i32
    %c0_i32_0 = arith.constant 0 : i32
    %c0_i32_1 = arith.constant 0 : i32
    return %c0_i32, %c0_i32_0 : i32, i32
  }
  func.func @transform_13(%arg0: i32) -> (i32, i32) {
    %c0_i32 = arith.constant 0 : i32
    %c0_i32_0 = arith.constant 0 : i32
    %c0_i32_1 = arith.constant 0 : i32
    return %c0_i32, %c0_i32_0 : i32, i32
  }
  func.func @transform_14(%arg0: i32) -> (i32, i32) {
    %c0_i32 = arith.constant 0 : i32
    %c0_i32_0 = arith.constant 0 : i32
    return %arg0, %c0_i32 : i32, i32
  }
}

</mosaic_0001>

<llo_original>
// kernel: tpu_custom_call.1
$region0: #{tpu_custom_call.1}
  #allocation0 [shape = 'u32[]', space=smem, size = 0x4, offset = 0x4, fixed_abs, tag = 'smem constant byte address 0x4 - core index']
  #allocation1 [shape = 'u32[144,128]{1,0:T(1,128)}', space=vmem, size = 0x12000, scoped, tag = 'internal scratch']
  %s0 = inlined_call_operand.hbm [shape: f32[8,32], index: 0, kind: input, shape index: {}]
  %s1 = inlined_call_operand.hbm [shape: f32[8,8], index: 1, kind: input, shape index: {}]
  %s2 = inlined_call_operand.hbm [shape: bf16[32,128], index: 2, kind: input, shape index: {}]
  %s3 = inlined_call_operand.vmem [shape: f32[1,128], index: 3, kind: input, shape index: {}]
  %s4 = inlined_call_operand.vmem [shape: f32[1,128], index: 4, kind: input, shape index: {}]
  %s5 = inlined_call_operand.vmem [shape: f32[1,128], index: 5, kind: input, shape index: {}]
  %s6 = inlined_call_operand.vmem [shape: f32[1,128], index: 6, kind: input, shape index: {}]
  %s7 = inlined_call_operand.vmem [shape: f32[1,128], index: 7, kind: input, shape index: {}]
  %s8 = inlined_call_operand.hbm [shape: bf16[128,128], index: 8, kind: input, shape index: {}]
  %s9 = inlined_call_operand.vmem [shape: f32[1,128], index: 9, kind: input, shape index: {}]
  %s10 = inlined_call_operand.vmem [shape: bf16[8,128], index: 10, kind: input, shape index: {}]
  %s11 = inlined_call_operand.vmem [shape: f32[1,128], index: 11, kind: input, shape index: {}]
  %s12 = inlined_call_operand.hbm [shape: bf16[128,128], index: 12, kind: input, shape index: {}]
  %s13 = inlined_call_operand.vmem [shape: f32[1,128], index: 13, kind: input, shape index: {}]
  %s14 = inlined_call_operand.vmem [shape: f32[8,1], index: 14, kind: output, shape index: {}]
  %s15 = sld [smem:[#allocation0]]
  $region86: #{tpu_custom_call.1} parent=0
    _
  %s17 = ssub.s32 1, %s15
  %s18 = scalar_select 0, %s17, %s15
  $region1: #{tpu_custom_call.1} parent=0
    #allocation2 [shape = 'u8[4096]{0}', space=vmem, size = 0x1000, scoped, tag = 'input window, operand 0, single buffered']
    #allocation3 [shape = 's32[1]{0}', space=sflag, size = 0x4, scoped, tag = 'scoped memory for tpu_custom_call.1']
    #allocation4 [shape = 'u8[4096]{0}', space=vmem, size = 0x1000, scoped, tag = 'input window, operand 1, single buffered']
    #allocation5 [shape = 's32[1]{0}', space=sflag, size = 0x4, scoped, tag = 'scoped memory for tpu_custom_call.1']
    #allocation6 [shape = 'u8[8192]{0}', space=vmem, size = 0x2000, scoped, tag = 'input window, operand 2, single buffered']
    #allocation7 [shape = 'u8[32768]{0}', space=vmem, size = 0x8000, scoped, tag = 'input window, operand 8, single buffered']
    #allocation8 [shape = 's32[1]{0}', space=sflag, size = 0x4, scoped, tag = 'scoped memory for tpu_custom_call.1']
    #allocation9 [shape = 'u8[32768]{0}', space=vmem, size = 0x8000, scoped, tag = 'input window, operand 12, single buffered']
    %19 = vsyncpa [#allocation3], 0
    %20 = vsyncpa [#allocation5], 0
    %21 = vsyncpa [#allocation8], 0
    // Predicated region
    $region2: #{tpu_custom_call.1} parent=1 // pred_check
      _
    $region3: #{tpu_custom_call.1} parent=1 // pred_check_branch
      %23 = sbr.rel (0) target = $region5
    $region4: #{tpu_custom_call.1} parent=1 // pred_region
      %s25 = ssub.s32 128, 128
      %26 = vsyncadd [#allocation3], %s25
      %s28 = sshll.u32 [#allocation2], 4
      %s29 = int_to_ptr.vmem [resolvable:$true] %s28
      %31 = dma.hbm_to_vmem [thread:$0]  %s0, 128, %s29, [#allocation3]
    $region5: #{tpu_custom_call.1} parent=1 // pred_fallthru
      _
    // Predicated region
    $region6: #{tpu_custom_call.1} parent=1 // pred_check
      _
    $region7: #{tpu_custom_call.1} parent=1 // pred_check_branch
      %33 = sbr.rel (0) target = $region9
    $region8: #{tpu_custom_call.1} parent=1 // pred_region
      %s35 = ssub.s32 128, 128
      %36 = vsyncadd [#allocation5], %s35
      %s38 = sshll.u32 [#allocation4], 4
      %s39 = int_to_ptr.vmem [resolvable:$true] %s38
      %41 = dma.hbm_to_vmem [thread:$0]  %s1, 128, %s39, [#allocation5]
    $region9: #{tpu_custom_call.1} parent=1 // pred_fallthru
      _
    // Predicated region
    $region10: #{tpu_custom_call.1} parent=1 // pred_check
      _
    $region11: #{tpu_custom_call.1} parent=1 // pred_check_branch
      %43 = sbr.rel (0) target = $region13
    $region12: #{tpu_custom_call.1} parent=1 // pred_region
      %s45 = ssub.s32 256, 256
      %46 = vsyncadd [#allocation5], %s45
      %s47 = sshll.u32 [#allocation6], 4
      %s48 = int_to_ptr.vmem [resolvable:$true] %s47
      %53 = dma.hbm_to_vmem [thread:$0]  %s2, 256, %s48, [#allocation5], 64, 64, 4
    $region13: #{tpu_custom_call.1} parent=1 // pred_fallthru
      _
    // Predicated region
    $region14: #{tpu_custom_call.1} parent=1 // pred_check
      _
    $region15: #{tpu_custom_call.1} parent=1 // pred_check_branch
      %55 = sbr.rel (0) target = $region17
    $region16: #{tpu_custom_call.1} parent=1 // pred_region
      _
    $region17: #{tpu_custom_call.1} parent=1 // pred_fallthru
      _
    // Predicated region
    $region18: #{tpu_custom_call.1} parent=1 // pred_check
      _
    $region19: #{tpu_custom_call.1} parent=1 // pred_check_branch
      %57 = sbr.rel (0) target = $region21
    $region20: #{tpu_custom_call.1} parent=1 // pred_region
      _
    $region21: #{tpu_custom_call.1} parent=1 // pred_fallthru
      _
    // Predicated region
    $region22: #{tpu_custom_call.1} parent=1 // pred_check
      _
    $region23: #{tpu_custom_call.1} parent=1 // pred_check_branch
      %59 = sbr.rel (0) target = $region25
    $region24: #{tpu_custom_call.1} parent=1 // pred_region
      _
    $region25: #{tpu_custom_call.1} parent=1 // pred_fallthru
      _
    // Predicated region
    $region26: #{tpu_custom_call.1} parent=1 // pred_check
      _
    $region27: #{tpu_custom_call.1} parent=1 // pred_check_branch
      %61 = sbr.rel (0) target = $region29
    $region28: #{tpu_custom_call.1} parent=1 // pred_region
      _
    $region29: #{tpu_custom_call.1} parent=1 // pred_fallthru
      _
    // Predicated region
    $region30: #{tpu_custom_call.1} parent=1 // pred_check
      _
    $region31: #{tpu_custom_call.1} parent=1 // pred_check_branch
      %63 = sbr.rel (0) target = $region33
    $region32: #{tpu_custom_call.1} parent=1 // pred_region
      _
    $region33: #{tpu_custom_call.1} parent=1 // pred_fallthru
      _
    // Predicated region
    $region34: #{tpu_custom_call.1} parent=1 // pred_check
      _
    $region35: #{tpu_custom_call.1} parent=1 // pred_check_branch
      %65 = sbr.rel (0) target = $region37
    $region36: #{tpu_custom_call.1} parent=1 // pred_region
      %s67 = ssub.s32 1024, 1024
      %68 = vsyncadd [#allocation8], %s67
      %s69 = sshll.u32 [#allocation7], 4
      %s70 = int_to_ptr.vmem [resolvable:$true] %s69
      %75 = dma.hbm_to_vmem [thread:$0]  %s8, 1024, %s70, [#allocation8], 64, 64, 4
    $region37: #{tpu_custom_call.1} parent=1 // pred_fallthru
      _
    // Predicated region
    $region38: #{tpu_custom_call.1} parent=1 // pred_check
      _
    $region39: #{tpu_custom_call.1} parent=1 // pred_check_branch
      %77 = sbr.rel (0) target = $region41
    $region40: #{tpu_custom_call.1} parent=1 // pred_region
      _
    $region41: #{tpu_custom_call.1} parent=1 // pred_fallthru
      _
    // Predicated region
    $region42: #{tpu_custom_call.1} parent=1 // pred_check
      _
    $region43: #{tpu_custom_call.1} parent=1 // pred_check_branch
      %79 = sbr.rel (0) target = $region45
    $region44: #{tpu_custom_call.1} parent=1 // pred_region
      _
    $region45: #{tpu_custom_call.1} parent=1 // pred_fallthru
      _
    // Predicated region
    $region46: #{tpu_custom_call.1} parent=1 // pred_check
      _
    $region47: #{tpu_custom_call.1} parent=1 // pred_check_branch
      %81 = sbr.rel (0) target = $region49
    $region48: #{tpu_custom_call.1} parent=1 // pred_region
      _
    $region49: #{tpu_custom_call.1} parent=1 // pred_fallthru
      _
    // Predicated region
    $region50: #{tpu_custom_call.1} parent=1 // pred_check
      _
    $region51: #{tpu_custom_call.1} parent=1 // pred_check_branch
      %83 = sbr.rel (0) target = $region53
    $region52: #{tpu_custom_call.1} parent=1 // pred_region
      %s85 = ssub.s32 1024, 1024
      %86 = vsyncadd [#allocation8], %s85
      %s87 = sshll.u32 [#allocation9], 4
      %s88 = int_to_ptr.vmem [resolvable:$true] %s87
      %93 = dma.hbm_to_vmem [thread:$0]  %s12, 1024, %s88, [#allocation8], 64, 64, 4
    $region53: #{tpu_custom_call.1} parent=1 // pred_fallthru
      _
    // Predicated region
    $region54: #{tpu_custom_call.1} parent=1 // pred_check
      _
    $region55: #{tpu_custom_call.1} parent=1 // pred_check_branch
      %95 = sbr.rel (0) target = $region57
    $region56: #{tpu_custom_call.1} parent=1 // pred_region
      _
    $region57: #{tpu_custom_call.1} parent=1 // pred_fallthru
      _
    // Predicated region
    $region58: #{tpu_custom_call.1} parent=1 // pred_check
      _
    $region59: #{tpu_custom_call.1} parent=1 // pred_check_branch
      %97 = sbr.rel (0) target = $region61
    $region60: #{tpu_custom_call.1} parent=1 // pred_region
      %98 = dma.done [#allocation3], 128
    $region61: #{tpu_custom_call.1} parent=1 // pred_fallthru
      _
    // Predicated region
    $region62: #{tpu_custom_call.1} parent=1 // pred_check
      _
    $region63: #{tpu_custom_call.1} parent=1 // pred_check_branch
      %100 = sbr.rel (0) target = $region65
    $region64: #{tpu_custom_call.1} parent=1 // pred_region
      %101 = dma.done [#allocation5], 128
    $region65: #{tpu_custom_call.1} parent=1 // pred_fallthru
      _
    // Predicated region
    $region66: #{tpu_custom_call.1} parent=1 // pred_check
      _
    $region67: #{tpu_custom_call.1} parent=1 // pred_check_branch
      %103 = sbr.rel (0) target = $region69
    $region68: #{tpu_custom_call.1} parent=1 // pred_region
      %104 = dma.done [#allocation5], 256
    $region69: #{tpu_custom_call.1} parent=1 // pred_fallthru
      _
    // Predicated region
    $region70: #{tpu_custom_call.1} parent=1 // pred_check
      _
    $region71: #{tpu_custom_call.1} parent=1 // pred_check_branch
      %106 = sbr.rel (0) target = $region73
    $region72: #{tpu_custom_call.1} parent=1 // pred_region
      %107 = dma.done [#allocation8], 1024
    $region73: #{tpu_custom_call.1} parent=1 // pred_fallthru
      _
    // Predicated region
    $region74: #{tpu_custom_call.1} parent=1 // pred_check
      _
    $region75: #{tpu_custom_call.1} parent=1 // pred_check_branch
      %109 = sbr.rel (0) target = $region77
    $region76: #{tpu_custom_call.1} parent=1 // pred_region
      %110 = dma.done [#allocation8], 1024
    $region77: #{tpu_custom_call.1} parent=1 // pred_fallthru
      _
    %v112 = vld [vmem:[#allocation2] sm:$0xff]
    %v113 = vpack.c.bf16 %v112, %v112
    %v114 = vld [vmem:[#allocation6] sm:$0xf]
    %v115 = vld [vmem:[#allocation6 + $0x4] sm:$0xf]
    %v116 = vld [vmem:[#allocation6 + $0x8] sm:$0xf]
    %v117 = vld [vmem:[#allocation6 + $0xc] sm:$0xf]
    %v118 = vld [vmem:[%s3] sm:$0x1]
    %v120 = vlaneseq
    %v121 = vshrl.u32 %v120, 7
    %v122 = vsub.s32 0, %v121
    %v123 = vrot.slane %v118, %v122
    %v129 = vunpack.c.l.b16 %v114
    %v130 = vunpack.c.l.b16 %v115
    %v131 = vunpack.c.l.b16 %v116
    %v132 = vunpack.c.l.b16 %v117
    %v133 = vpack.c.b16 %v130, %v129
    %v134 = vpack.c.b16 %v132, %v131
    %vm137 = vcmask 261120
    %v139 = vsel %vm137, %v113, 0
    %141 = vmatprep.subr.bf16.mxu0 0
    %142 = vmatpush1.bf16.msra.mxu0 %v133
    %143 = vmatprep.subr.bf16.mxu0 0
    %144 = vmatpush1.bf16.msra.mxu0 %v134
    %145 = vmatprep.subr.bf16.mxu0 0
    %146 = vmatpush1.bf16.msra.mxu0 0
    %147 = vmatprep.subr.bf16.mxu0 0
    %148 = vmatpush1.bf16.msra.mxu0 0
    %149 = vmatprep.subr.bf16.mxu0 0
    %150 = vmatpush1.bf16.msra.mxu0 0
    %151 = vmatprep.subr.bf16.mxu0 0
    %152 = vmatpush1.bf16.msra.mxu0 0
    %153 = vmatprep.subr.bf16.mxu0 0
    %154 = vmatpush1.bf16.msra.mxu0 0
    %155 = vmatprep.subr.bf16.mxu0 0
    %156 = vmatpush1.bf16.msra.mxu0 0
    %157 = vmatprep.subr.bf16.mxu0 0
    %158 = vmatpush1.bf16.msra.mxu0 0
    %159 = vmatprep.subr.bf16.mxu0 0
    %160 = vmatpush1.bf16.msra.mxu0 0
    %161 = vmatprep.subr.bf16.mxu0 0
    %162 = vmatpush1.bf16.msra.mxu0 0
    %163 = vmatprep.subr.bf16.mxu0 0
    %164 = vmatpush1.bf16.msra.mxu0 0
    %165 = vmatprep.subr.bf16.mxu0 0
    %166 = vmatpush1.bf16.msra.mxu0 0
    %167 = vmatprep.subr.bf16.mxu0 0
    %168 = vmatpush1.bf16.msra.mxu0 0
    %169 = vmatprep.subr.bf16.mxu0 0
    %170 = vmatpush1.bf16.msra.mxu0 0
    %171 = vmatprep.subr.bf16.mxu0 0
    %172 = vmatpush1.bf16.msra.mxu0 0
    %173 = vmatprep.mubr.bf16.mxu0 0
    %174 = vmatmul.mubr.bf16.gmra.mrb[0].mxu0 %v139
    %v175 = vpop.f32.mrb[0].mxu0
    %v176 = vadd.f32 %v123, %v175
    %v177 = vpop.f32.mrb[0].mxu0
    %v178 = vpop.f32.mrb[0].mxu0
    %v179 = vpop.f32.mrb[0].mxu0
    %180 = vdwg.mxu0
    %v181 = vld [vmem:[%s4] sm:$0x1]
    %v182 = vld [vmem:[%s5] sm:$0x1]
    %183 = vadd.xlane.f32.xlu0 %v176
    %v184 = vpop.xlane.xlu0 %183
    %v185 = vmul.f32 %v184, 0.03125
    %v186 = vmul.f32 %v176, %v176
    %187 = vadd.xlane.f32.xlu0 %v186
    %v188 = vpop.xlane.xlu0 %187
    %v189 = vmul.f32 %v188, 0.03125
    %v190 = vmul.f32 %v185, %v185
    %v191 = vsub.f32 %v189, %v190
    %v192 = vmax.f32 %v191, 0.0
    %v193 = vsub.f32 %v176, %v185
    %v194 = vadd.f32 %v192, 1e-05
    %v195 = vrsqrt.pop %v194
    %v196 = vmul.f32 %v193, %v195
    %v198 = vlaneseq
    %v199 = vshrl.u32 %v198, 7
    %v200 = vsub.s32 0, %v199
    %v201 = vrot.slane %v181, %v200
    %v203 = vmul.f32 %v196, %v201
    %v205 = vlaneseq
    %v206 = vshrl.u32 %v205, 7
    %v207 = vsub.s32 0, %v206
    %v208 = vrot.slane %v182, %v207
    %v210 = vadd.f32 %v203, %v208
    %v211 = vmax.f32 %v210, 0.0
    %v212 = vld [vmem:[%s6] sm:$0x1]
    %v213 = vld [vmem:[%s7] sm:$0x1]
    %214 = vadd.xlane.f32.xlu0 %v211
    %v215 = vpop.xlane.xlu0 %214
    %v216 = vmul.f32 %v215, 0.03125
    %v217 = vmul.f32 %v211, %v211
    %218 = vadd.xlane.f32.xlu0 %v217
    %v219 = vpop.xlane.xlu0 %218
    %v220 = vmul.f32 %v219, 0.03125
    %v221 = vmul.f32 %v216, %v216
    %v222 = vsub.f32 %v220, %v221
    %v223 = vmax.f32 %v222, 0.0
    %v224 = vsub.f32 %v211, %v216
    %v225 = vadd.f32 %v223, 1e-05
    %v226 = vrsqrt.pop %v225
    %v227 = vmul.f32 %v224, %v226
    %v229 = vlaneseq
    %v230 = vshrl.u32 %v229, 7
    %v231 = vsub.s32 0, %v230
    %v232 = vrot.slane %v212, %v231
    %v234 = vmul.f32 %v227, %v232
    %v236 = vlaneseq
    %v237 = vshrl.u32 %v236, 7
    %v238 = vsub.s32 0, %v237
    %v239 = vrot.slane %v213, %v238
    %v241 = vadd.f32 %v234, %v239
    %v242 = vpack.c.bf16 %v241, %v241
    %v243 = vld [vmem:[#allocation7] sm:$0xf]
    %v244 = vld [vmem:[#allocation7 + $0x4] sm:$0xf]
    %v245 = vld [vmem:[#allocation7 + $0x8] sm:$0xf]
    %v246 = vld [vmem:[#allocation7 + $0xc] sm:$0xf]
    %v247 = vld [vmem:[#allocation7 + $0x10] sm:$0xf]
    %v248 = vld [vmem:[#allocation7 + $0x14] sm:$0xf]
    %v249 = vld [vmem:[#allocation7 + $0x18] sm:$0xf]
    %v250 = vld [vmem:[#allocation7 + $0x1c] sm:$0xf]
    %v251 = vld [vmem:[#allocation7 + $0x20] sm:$0xf]
    %v252 = vld [vmem:[#allocation7 + $0x24] sm:$0xf]
    %v253 = vld [vmem:[#allocation7 + $0x28] sm:$0xf]
    %v254 = vld [vmem:[#allocation7 + $0x2c] sm:$0xf]
    %v255 = vld [vmem:[#allocation7 + $0x30] sm:$0xf]
    %v256 = vld [vmem:[#allocation7 + $0x34] sm:$0xf]
    %v257 = vld [vmem:[#allocation7 + $0x38] sm:$0xf]
    %v258 = vld [vmem:[#allocation7 + $0x3c] sm:$0xf]
    %v259 = vld [vmem:[%s9] sm:$0x1]
    %v261 = vlaneseq
    %v262 = vshrl.u32 %v261, 7
    %v263 = vsub.s32 0, %v262
    %v264 = vrot.slane %v259, %v263
    %v282 = vunpack.c.l.b16 %v243
    %v283 = vunpack.c.l.b16 %v244
    %v284 = vunpack.c.l.b16 %v245
    %v285 = vunpack.c.l.b16 %v246
    %v286 = vunpack.c.l.b16 %v247
    %v287 = vunpack.c.l.b16 %v248
    %v288 = vunpack.c.l.b16 %v249
    %v289 = vunpack.c.l.b16 %v250
    %v290 = vunpack.c.l.b16 %v251
    %v291 = vunpack.c.l.b16 %v252
    %v292 = vunpack.c.l.b16 %v253
    %v293 = vunpack.c.l.b16 %v254
    %v294 = vunpack.c.l.b16 %v255
    %v295 = vunpack.c.l.b16 %v256
    %v296 = vunpack.c.l.b16 %v257
    %v297 = vunpack.c.l.b16 %v258
    %v298 = vpack.c.b16 %v283, %v282
    %v299 = vpack.c.b16 %v285, %v284
    %v300 = vpack.c.b16 %v287, %v286
    %v301 = vpack.c.b16 %v289, %v288
    %v302 = vpack.c.b16 %v291, %v290
    %v303 = vpack.c.b16 %v293, %v292
    %v304 = vpack.c.b16 %v295, %v294
    %v305 = vpack.c.b16 %v297, %v296
    %314 = vmatprep.subr.bf16.mxu0 0
    %315 = vmatpush1.bf16.msra.mxu0 %v298
    %316 = vmatprep.subr.bf16.mxu0 0
    %317 = vmatpush1.bf16.msra.mxu0 %v299
    %318 = vmatprep.subr.bf16.mxu0 0
    %319 = vmatpush1.bf16.msra.mxu0 %v300
    %320 = vmatprep.subr.bf16.mxu0 0
    %321 = vmatpush1.bf16.msra.mxu0 %v301
    %322 = vmatprep.subr.bf16.mxu0 0
    %323 = vmatpush1.bf16.msra.mxu0 %v302
    %324 = vmatprep.subr.bf16.mxu0 0
    %325 = vmatpush1.bf16.msra.mxu0 %v303
    %326 = vmatprep.subr.bf16.mxu0 0
    %327 = vmatpush1.bf16.msra.mxu0 %v304
    %328 = vmatprep.subr.bf16.mxu0 0
    %329 = vmatpush1.bf16.msra.mxu0 %v305
    %330 = vmatprep.subr.bf16.mxu0 0
    %331 = vmatpush1.bf16.msra.mxu0 0
    %332 = vmatprep.subr.bf16.mxu0 0
    %333 = vmatpush1.bf16.msra.mxu0 0
    %334 = vmatprep.subr.bf16.mxu0 0
    %335 = vmatpush1.bf16.msra.mxu0 0
    %336 = vmatprep.subr.bf16.mxu0 0
    %337 = vmatpush1.bf16.msra.mxu0 0
    %338 = vmatprep.subr.bf16.mxu0 0
    %339 = vmatpush1.bf16.msra.mxu0 0
    %340 = vmatprep.subr.bf16.mxu0 0
    %341 = vmatpush1.bf16.msra.mxu0 0
    %342 = vmatprep.subr.bf16.mxu0 0
    %343 = vmatpush1.bf16.msra.mxu0 0
    %344 = vmatprep.subr.bf16.mxu0 0
    %345 = vmatpush1.bf16.msra.mxu0 0
    %346 = vmatprep.mubr.bf16.mxu0 0
    %347 = vmatmul.mubr.bf16.gmra.mrb[0].mxu0 %v242
    %v348 = vpop.f32.mrb[0].mxu0
    %v349 = vadd.f32 %v264, %v348
    %v350 = vpop.f32.mrb[0].mxu0
    %v351 = vpop.f32.mrb[0].mxu0
    %v352 = vpop.f32.mrb[0].mxu0
    %353 = vdwg.mxu0
    %v354 = vld [vmem:[#allocation4] sm:$0xff]
    %v355 = vpack.c.bf16 %v354, %v354
    %v356 = vld [vmem:[%s10] sm:$0xf]
    %v357 = vld [vmem:[%s11] sm:$0x1]
    %v359 = vlaneseq
    %v360 = vshrl.u32 %v359, 7
    %v361 = vsub.s32 0, %v360
    %v362 = vrot.slane %v357, %v361
    %vm364 = vcmask 64512
    %v366 = vsel %vm364, %v355, 0
    %vm368 = vcmask 1043456
    %v370 = vsel %vm368, %v356, 0
    %372 = vmatprep.subr.bf16.mxu0 0
    %373 = vmatpush1.bf16.msra.mxu0 %v370
    %374 = vmatprep.subr.bf16.mxu0 0
    %375 = vmatpush1.bf16.msra.mxu0 0
    %376 = vmatprep.subr.bf16.mxu0 0
    %377 = vmatpush1.bf16.msra.mxu0 0
    %378 = vmatprep.subr.bf16.mxu0 0
    %379 = vmatpush1.bf16.msra.mxu0 0
    %380 = vmatprep.subr.bf16.mxu0 0
    %381 = vmatpush1.bf16.msra.mxu0 0
    %382 = vmatprep.subr.bf16.mxu0 0
    %383 = vmatpush1.bf16.msra.mxu0 0
    %384 = vmatprep.subr.bf16.mxu0 0
    %385 = vmatpush1.bf16.msra.mxu0 0
    %386 = vmatprep.subr.bf16.mxu0 0
    %387 = vmatpush1.bf16.msra.mxu0 0
    %388 = vmatprep.subr.bf16.mxu0 0
    %389 = vmatpush1.bf16.msra.mxu0 0
    %390 = vmatprep.subr.bf16.mxu0 0
    %391 = vmatpush1.bf16.msra.mxu0 0
    %392 = vmatprep.subr.bf16.mxu0 0
    %393 = vmatpush1.bf16.msra.mxu0 0
    %394 = vmatprep.subr.bf16.mxu0 0
    %395 = vmatpush1.bf16.msra.mxu0 0
    %396 = vmatprep.subr.bf16.mxu0 0
    %397 = vmatpush1.bf16.msra.mxu0 0
    %398 = vmatprep.subr.bf16.mxu0 0
    %399 = vmatpush1.bf16.msra.mxu0 0
    %400 = vmatprep.subr.bf16.mxu0 0
    %401 = vmatpush1.bf16.msra.mxu0 0
    %402 = vmatprep.subr.bf16.mxu0 0
    %403 = vmatpush1.bf16.msra.mxu0 0
    %404 = vmatprep.mubr.bf16.mxu0 0
    %405 = vmatmul.mubr.bf16.gmra.mrb[0].mxu0 %v366
    %v406 = vpop.f32.mrb[0].mxu0
    %v407 = vadd.f32 %v362, %v406
    %v408 = vpop.f32.mrb[0].mxu0
    %v409 = vpop.f32.mrb[0].mxu0
    %v410 = vpop.f32.mrb[0].mxu0
    %411 = vdwg.mxu0
    %v412 = vmax.f32 %v407, 0.0
    %v413 = vadd.f32 %v349, %v412
    %v414 = vmax.f32 %v413, 0.0
    %v415 = vpack.c.bf16 %v414, %v414
    %v416 = vld [vmem:[#allocation9] sm:$0xf]
    %v417 = vld [vmem:[#allocation9 + $0x4] sm:$0xf]
    %v418 = vld [vmem:[#allocation9 + $0x8] sm:$0xf]
    %v419 = vld [vmem:[#allocation9 + $0xc] sm:$0xf]
    %v420 = vld [vmem:[#allocation9 + $0x10] sm:$0xf]
    %v421 = vld [vmem:[#allocation9 + $0x14] sm:$0xf]
    %v422 = vld [vmem:[#allocation9 + $0x18] sm:$0xf]
    %v423 = vld [vmem:[#allocation9 + $0x1c] sm:$0xf]
    %v424 = vld [vmem:[#allocation9 + $0x20] sm:$0xf]
    %v425 = vld [vmem:[#allocation9 + $0x24] sm:$0xf]
    %v426 = vld [vmem:[#allocation9 + $0x28] sm:$0xf]
    %v427 = vld [vmem:[#allocation9 + $0x2c] sm:$0xf]
    %v428 = vld [vmem:[#allocation9 + $0x30] sm:$0xf]
    %v429 = vld [vmem:[#allocation9 + $0x34] sm:$0xf]
    %v430 = vld [vmem:[#allocation9 + $0x38] sm:$0xf]
    %v431 = vld [vmem:[#allocation9 + $0x3c] sm:$0xf]
    %v432 = vld [vmem:[%s13] sm:$0x1]
    %v434 = vlaneseq
    %v435 = vshrl.u32 %v434, 7
    %v436 = vsub.s32 0, %v435
    %v437 = vrot.slane %v432, %v436
    %v455 = vunpack.c.l.b16 %v416
    %v456 = vunpack.c.l.b16 %v417
    %v457 = vunpack.c.l.b16 %v418
    %v458 = vunpack.c.l.b16 %v419
    %v459 = vunpack.c.l.b16 %v420
    %v460 = vunpack.c.l.b16 %v421
    %v461 = vunpack.c.l.b16 %v422
    %v462 = vunpack.c.l.b16 %v423
    %v463 = vunpack.c.l.b16 %v424
    %v464 = vunpack.c.l.b16 %v425
    %v465 = vunpack.c.l.b16 %v426
    %v466 = vunpack.c.l.b16 %v427
    %v467 = vunpack.c.l.b16 %v428
    %v468 = vunpack.c.l.b16 %v429
    %v469 = vunpack.c.l.b16 %v430
    %v470 = vunpack.c.l.b16 %v431
    %v471 = vpack.c.b16 %v456, %v455
    %v472 = vpack.c.b16 %v458, %v457
    %v473 = vpack.c.b16 %v460, %v459
    %v474 = vpack.c.b16 %v462, %v461
    %v475 = vpack.c.b16 %v464, %v463
    %v476 = vpack.c.b16 %v466, %v465
    %v477 = vpack.c.b16 %v468, %v467
    %v478 = vpack.c.b16 %v470, %v469
    %487 = vmatprep.subr.bf16.mxu0 0
    %488 = vmatpush1.bf16.msra.mxu0 %v471
    %489 = vmatprep.subr.bf16.mxu0 0
    %490 = vmatpush1.bf16.msra.mxu0 %v472
    %491 = vmatprep.subr.bf16.mxu0 0
    %492 = vmatpush1.bf16.msra.mxu0 %v473
    %493 = vmatprep.subr.bf16.mxu0 0
    %494 = vmatpush1.bf16.msra.mxu0 %v474
    %495 = vmatprep.subr.bf16.mxu0 0
    %496 = vmatpush1.bf16.msra.mxu0 %v475
    %497 = vmatprep.subr.bf16.mxu0 0
    %498 = vmatpush1.bf16.msra.mxu0 %v476
    %499 = vmatprep.subr.bf16.mxu0 0
    %500 = vmatpush1.bf16.msra.mxu0 %v477
    %501 = vmatprep.subr.bf16.mxu0 0
    %502 = vmatpush1.bf16.msra.mxu0 %v478
    %503 = vmatprep.subr.bf16.mxu0 0
    %504 = vmatpush1.bf16.msra.mxu0 0
    %505 = vmatprep.subr.bf16.mxu0 0
    %506 = vmatpush1.bf16.msra.mxu0 0
    %507 = vmatprep.subr.bf16.mxu0 0
    %508 = vmatpush1.bf16.msra.mxu0 0
    %509 = vmatprep.subr.bf16.mxu0 0
    %510 = vmatpush1.bf16.msra.mxu0 0
    %511 = vmatprep.subr.bf16.mxu0 0
    %512 = vmatpush1.bf16.msra.mxu0 0
    %513 = vmatprep.subr.bf16.mxu0 0
    %514 = vmatpush1.bf16.msra.mxu0 0
    %515 = vmatprep.subr.bf16.mxu0 0
    %516 = vmatpush1.bf16.msra.mxu0 0
    %517 = vmatprep.subr.bf16.mxu0 0
    %518 = vmatpush1.bf16.msra.mxu0 0
    %519 = vmatprep.mubr.bf16.mxu0 0
    %520 = vmatmul.mubr.bf16.gmra.mrb[0].mxu0 %v415
    %v521 = vpop.f32.mrb[0].mxu0
    %v522 = vadd.f32 %v437, %v521
    %v523 = vpop.f32.mrb[0].mxu0
    %v524 = vpop.f32.mrb[0].mxu0
    %v525 = vpop.f32.mrb[0].mxu0
    %526 = vdwg.mxu0
    %vm527 = vcmask 7168
    %528 = vst.msk [vmem:[%s14] sm:$0xff] %vm527, %v522
    // Predicated region
    $region78: #{tpu_custom_call.1} parent=1 // pred_check
      _
    $region79: #{tpu_custom_call.1} parent=1 // pred_check_branch
      %530 = sbr.rel (0) target = $region81
    $region80: #{tpu_custom_call.1} parent=1 // pred_region
      _
    $region81: #{tpu_custom_call.1} parent=1 // pred_fallthru
      _
    // Predicated region
    $region82: #{tpu_custom_call.1} parent=1 // pred_check
      _
    $region83: #{tpu_custom_call.1} parent=1 // pred_check_branch
      %532 = sbr.rel (0) target = $region85
    $region84: #{tpu_custom_call.1} parent=1 // pred_region
      _
    $region85: #{tpu_custom_call.1} parent=1 // pred_fallthru
      _
    %533 = vsyncpa [#allocation3], 1
    %534 = vsyncpa [#allocation5], 1
    %535 = vsyncpa [#allocation8], 1

// kernel: tpu_custom_call.1
$region0: #{tpu_custom_call.1}
  #allocation0 [shape = 'u32[]', space=smem, size = 0x4, offset = 0x4, fixed_abs, tag = 'smem constant byte address 0x4 - core index']
  #allocation1 [shape = 'u32[144,128]{1,0:T(1,128)}', space=vmem, size = 0x12000, scoped, tag = 'internal scratch']
  %s0 = inlined_call_operand.hbm [shape: f32[8,32], index: 0, kind: input, shape index: {}]
  %s1 = inlined_call_operand.hbm [shape: f32[8,8], index: 1, kind: input, shape index: {}]
  %s2 = inlined_call_operand.hbm [shape: bf16[32,128], index: 2, kind: input, shape index: {}]
  %s3 = inlined_call_operand.vmem [shape: f32[1,128], index: 3, kind: input, shape index: {}]
  %s4 = inlined_call_operand.vmem [shape: f32[1,128], index: 4, kind: input, shape index: {}]
  %s5 = inlined_call_operand.vmem [shape: f32[1,128], index: 5, kind: input, shape index: {}]
  %s6 = inlined_call_operand.vmem [shape: f32[1,128], index: 6, kind: input, shape index: {}]
  %s7 = inlined_call_operand.vmem [shape: f32[1,128], index: 7, kind: input, shape index: {}]
  %s8 = inlined_call_operand.hbm [shape: bf16[128,128], index: 8, kind: input, shape index: {}]
  %s9 = inlined_call_operand.vmem [shape: f32[1,128], index: 9, kind: input, shape index: {}]
  %s10 = inlined_call_operand.vmem [shape: bf16[8,128], index: 10, kind: input, shape index: {}]
  %s11 = inlined_call_operand.vmem [shape: f32[1,128], index: 11, kind: input, shape index: {}]
  %s12 = inlined_call_operand.hbm [shape: bf16[128,128], index: 12, kind: input, shape index: {}]
  %s13 = inlined_call_operand.vmem [shape: f32[1,128], index: 13, kind: input, shape index: {}]
  %s14 = inlined_call_operand.vmem [shape: f32[8,1], index: 14, kind: output, shape index: {}]
  %s15 = sld [smem:[#allocation0]]
  $region86: #{tpu_custom_call.1} parent=0
    _
  %s17 = ssub.s32 1, %s15
  %s18 = scalar_select 0, %s17, %s15
  $region1: #{tpu_custom_call.1} parent=0
    #allocation2 [shape = 'u8[4096]{0}', space=vmem, size = 0x1000, scoped, tag = 'input window, operand 0, single buffered']
    #allocation3 [shape = 's32[1]{0}', space=sflag, size = 0x4, scoped, tag = 'scoped memory for tpu_custom_call.1']
    #allocation4 [shape = 'u8[4096]{0}', space=vmem, size = 0x1000, scoped, tag = 'input window, operand 1, single buffered']
    #allocation5 [shape = 's32[1]{0}', space=sflag, size = 0x4, scoped, tag = 'scoped memory for tpu_custom_call.1']
    #allocation6 [shape = 'u8[8192]{0}', space=vmem, size = 0x2000, scoped, tag = 'input window, operand 2, single buffered']
    #allocation7 [shape = 'u8[32768]{0}', space=vmem, size = 0x8000, scoped, tag = 'input window, operand 8, single buffered']
    #allocation8 [shape = 's32[1]{0}', space=sflag, size = 0x4, scoped, tag = 'scoped memory for tpu_custom_call.1']
    #allocation9 [shape = 'u8[32768]{0}', space=vmem, size = 0x8000, scoped, tag = 'input window, operand 12, single buffered']
    %19 = vsyncpa [#allocation3], 0
    %20 = vsyncpa [#allocation5], 0
    %21 = vsyncpa [#allocation8], 0
    // Predicated region
    $region2: #{tpu_custom_call.1} parent=1 // pred_check
      _
    $region3: #{tpu_custom_call.1} parent=1 // pred_check_branch
      %23 = sbr.rel (0) target = $region5
    $region4: #{tpu_custom_call.1} parent=1 // pred_region
      %s25 = ssub.s32 128, 128
      %26 = vsyncadd [#allocation3], %s25
      %s28 = sshll.u32 [#allocation2], 4
      %s29 = int_to_ptr.vmem [resolvable:$true] %s28
      %31 = dma.hbm_to_vmem [thread:$0]  %s0, 128, %s29, [#allocation3]
    $region5: #{tpu_custom_call.1} parent=1 // pred_fallthru
      _
    // Predicated region
    $region6: #{tpu_custom_call.1} parent=1 // pred_check
      _
    $region7: #{tpu_custom_call.1} parent=1 // pred_check_branch
      %33 = sbr.rel (0) target = $region9
    $region8: #{tpu_custom_call.1} parent=1 // pred_region
      %s35 = ssub.s32 128, 128
      %36 = vsyncadd [#allocation5], %s35
      %s38 = sshll.u32 [#allocation4], 4
      %s39 = int_to_ptr.vmem [resolvable:$true] %s38
      %41 = dma.hbm_to_vmem [thread:$0]  %s1, 128, %s39, [#allocation5]
    $region9: #{tpu_custom_call.1} parent=1 // pred_fallthru
      _
    // Predicated region
    $region10: #{tpu_custom_call.1} parent=1 // pred_check
      _
    $region11: #{tpu_custom_call.1} parent=1 // pred_check_branch
      %43 = sbr.rel (0) target = $region13
    $region12: #{tpu_custom_call.1} parent=1 // pred_region
      %s45 = ssub.s32 256, 256
      %46 = vsyncadd [#allocation5], %s45
      %s47 = sshll.u32 [#allocation6], 4
      %s48 = int_to_ptr.vmem [resolvable:$true] %s47
      %53 = dma.hbm_to_vmem [thread:$0]  %s2, 256, %s48, [#allocation5], 64, 64, 4
    $region13: #{tpu_custom_call.1} parent=1 // pred_fallthru
      _
    // Predicated region
    $region14: #{tpu_custom_call.1} parent=1 // pred_check
      _
    $region15: #{tpu_custom_call.1} parent=1 // pred_check_branch
      %55 = sbr.rel (0) target = $region17
    $region16: #{tpu_custom_call.1} parent=1 // pred_region
      _
    $region17: #{tpu_custom_call.1} parent=1 // pred_fallthru
      _
    // Predicated region
    $region18: #{tpu_custom_call.1} parent=1 // pred_check
      _
    $region19: #{tpu_custom_call.1} parent=1 // pred_check_branch
      %57 = sbr.rel (0) target = $region21
    $region20: #{tpu_custom_call.1} parent=1 // pred_region
      _
    $region21: #{tpu_custom_call.1} parent=1 // pred_fallthru
      _
    // Predicated region
    $region22: #{tpu_custom_call.1} parent=1 // pred_check
      _
    $region23: #{tpu_custom_call.1} parent=1 // pred_check_branch
      %59 = sbr.rel (0) target = $region25
    $region24: #{tpu_custom_call.1} parent=1 // pred_region
      _
    $region25: #{tpu_custom_call.1} parent=1 // pred_fallthru
      _
    // Predicated region
    $region26: #{tpu_custom_call.1} parent=1 // pred_check
      _
    $region27: #{tpu_custom_call.1} parent=1 // pred_check_branch
      %61 = sbr.rel (0) target = $region29
    $region28: #{tpu_custom_call.1} parent=1 // pred_region
      _
    $region29: #{tpu_custom_call.1} parent=1 // pred_fallthru
      _
    // Predicated region
    $region30: #{tpu_custom_call.1} parent=1 // pred_check
      _
    $region31: #{tpu_custom_call.1} parent=1 // pred_check_branch
      %63 = sbr.rel (0) target = $region33
    $region32: #{tpu_custom_call.1} parent=1 // pred_region
      _
    $region33: #{tpu_custom_call.1} parent=1 // pred_fallthru
      _
    // Predicated region
    $region34: #{tpu_custom_call.1} parent=1 // pred_check
      _
    $region35: #{tpu_custom_call.1} parent=1 // pred_check_branch
      %65 = sbr.rel (0) target = $region37
    $region36: #{tpu_custom_call.1} parent=1 // pred_region
      %s67 = ssub.s32 1024, 1024
      %68 = vsyncadd [#allocation8], %s67
      %s69 = sshll.u32 [#allocation7], 4
      %s70 = int_to_ptr.vmem [resolvable:$true] %s69
      %75 = dma.hbm_to_vmem [thread:$0]  %s8, 1024, %s70, [#allocation8], 64, 64, 4
    $region37: #{tpu_custom_call.1} parent=1 // pred_fallthru
      _
    // Predicated region
    $region38: #{tpu_custom_call.1} parent=1 // pred_check
      _
    $region39: #{tpu_custom_call.1} parent=1 // pred_check_branch
      %77 = sbr.rel (0) target = $region41
    $region40: #{tpu_custom_call.1} parent=1 // pred_region
      _
    $region41: #{tpu_custom_call.1} parent=1 // pred_fallthru
      _
    // Predicated region
    $region42: #{tpu_custom_call.1} parent=1 // pred_check
      _
    $region43: #{tpu_custom_call.1} parent=1 // pred_check_branch
      %79 = sbr.rel (0) target = $region45
    $region44: #{tpu_custom_call.1} parent=1 // pred_region
      _
    $region45: #{tpu_custom_call.1} parent=1 // pred_fallthru
      _
    // Predicated region
    $region46: #{tpu_custom_call.1} parent=1 // pred_check
      _
    $region47: #{tpu_custom_call.1} parent=1 // pred_check_branch
      %81 = sbr.rel (0) target = $region49
    $region48: #{tpu_custom_call.1} parent=1 // pred_region
      _
    $region49: #{tpu_custom_call.1} parent=1 // pred_fallthru
      _
    // Predicated region
    $region50: #{tpu_custom_call.1} parent=1 // pred_check
      _
    $region51: #{tpu_custom_call.1} parent=1 // pred_check_branch
      %83 = sbr.rel (0) target = $region53
    $region52: #{tpu_custom_call.1} parent=1 // pred_region
      %s85 = ssub.s32 1024, 1024
      %86 = vsyncadd [#allocation8], %s85
      %s87 = sshll.u32 [#allocation9], 4
      %s88 = int_to_ptr.vmem [resolvable:$true] %s87
      %93 = dma.hbm_to_vmem [thread:$0]  %s12, 1024, %s88, [#allocation8], 64, 64, 4
    $region53: #{tpu_custom_call.1} parent=1 // pred_fallthru
      _
    // Predicated region
    $region54: #{tpu_custom_call.1} parent=1 // pred_check
      _
    $region55: #{tpu_custom_call.1} parent=1 // pred_check_branch
      %95 = sbr.rel (0) target = $region57
    $region56: #{tpu_custom_call.1} parent=1 // pred_region
      _
    $region57: #{tpu_custom_call.1} parent=1 // pred_fallthru
      _
    // Predicated region
    $region58: #{tpu_custom_call.1} parent=1 // pred_check
      _
    $region59: #{tpu_custom_call.1} parent=1 // pred_check_branch
      %97 = sbr.rel (0) target = $region61
    $region60: #{tpu_custom_call.1} parent=1 // pred_region
      %98 = dma.done [#allocation3], 128
    $region61: #{tpu_custom_call.1} parent=1 // pred_fallthru
      _
    // Predicated region
    $region62: #{tpu_custom_call.1} parent=1 // pred_check
      _
    $region63: #{tpu_custom_call.1} parent=1 // pred_check_branch
      %100 = sbr.rel (0) target = $region65
    $region64: #{tpu_custom_call.1} parent=1 // pred_region
      %101 = dma.done [#allocation5], 128
    $region65: #{tpu_custom_call.1} parent=1 // pred_fallthru
      _
    // Predicated region
    $region66: #{tpu_custom_call.1} parent=1 // pred_check
      _
    $region67: #{tpu_custom_call.1} parent=1 // pred_check_branch
      %103 = sbr.rel (0) target = $region69
    $region68: #{tpu_custom_call.1} parent=1 // pred_region
      %104 = dma.done [#allocation5], 256
    $region69: #{tpu_custom_call.1} parent=1 // pred_fallthru
      _
    // Predicated region
    $region70: #{tpu_custom_call.1} parent=1 // pred_check
      _
    $region71: #{tpu_custom_call.1} parent=1 // pred_check_branch
      %106 = sbr.rel (0) target = $region73
    $region72: #{tpu_custom_call.1} parent=1 // pred_region
      %107 = dma.done [#allocation8], 1024
    $region73: #{tpu_custom_call.1} parent=1 // pred_fallthru
      _
    // Predicated region
    $region74: #{tpu_custom_call.1} parent=1 // pred_check
      _
    $region75: #{tpu_custom_call.1} parent=1 // pred_check_branch
      %109 = sbr.rel (0) target = $region77
    $region76: #{tpu_custom_call.1} parent=1 // pred_region
      %110 = dma.done [#allocation8], 1024
    $region77: #{tpu_custom_call.1} parent=1 // pred_fallthru
      _
    %v112 = vld [vmem:[#allocation2] sm:$0xff]
    %v113 = vpack.c.bf16 %v112, %v112
    %v114 = vld [vmem:[#allocation6] sm:$0xf]
    %v115 = vld [vmem:[#allocation6 + $0x4] sm:$0xf]
    %v116 = vld [vmem:[#allocation6 + $0x8] sm:$0xf]
    %v117 = vld [vmem:[#allocation6 + $0xc] sm:$0xf]
    %v118 = vld [vmem:[%s3] sm:$0x1]
    %v120 = vlaneseq
    %v121 = vshrl.u32 %v120, 7
    %v122 = vsub.s32 0, %v121
    %v123 = vrot.slane %v118, %v122
    %v129 = vunpack.c.l.b16 %v114
    %v130 = vunpack.c.l.b16 %v115
    %v131 = vunpack.c.l.b16 %v116
    %v132 = vunpack.c.l.b16 %v117
    %v133 = vpack.c.b16 %v130, %v129
    %v134 = vpack.c.b16 %v132, %v131
    %vm137 = vcmask 261120
    %v139 = vsel %vm137, %v113, 0
    %141 = vmatprep.subr.bf16.mxu0 0
    %142 = vmatpush1.bf16.msra.mxu0 %v133
    %143 = vmatprep.subr.bf16.mxu0 0
    %144 = vmatpush1.bf16.msra.mxu0 %v134
    %145 = vmatprep.subr.bf16.mxu0 0
    %146 = vmatpush1.bf16.msra.mxu0 0
    %147 = vmatprep.subr.bf16.mxu0 0
    %148 = vmatpush1.bf16.msra.mxu0 0
    %149 = vmatprep.subr.bf16.mxu0 0
    %150 = vmatpush1.bf16.msra.mxu0 0
    %151 = vmatprep.subr.bf16.mxu0 0
    %152 = vmatpush1.bf16.msra.mxu0 0
    %153 = vmatprep.subr.bf16.mxu0 0
    %154 = vmatpush1.bf16.msra.mxu0 0
    %155 = vmatprep.subr.bf16.mxu0 0
    %156 = vmatpush1.bf16.msra.mxu0 0
    %157 = vmatprep.subr.bf16.mxu0 0
    %158 = vmatpush1.bf16.msra.mxu0 0
    %159 = vmatprep.subr.bf16.mxu0 0
    %160 = vmatpush1.bf16.msra.mxu0 0
    %161 = vmatprep.subr.bf16.mxu0 0
    %162 = vmatpush1.bf16.msra.mxu0 0
    %163 = vmatprep.subr.bf16.mxu0 0
    %164 = vmatpush1.bf16.msra.mxu0 0
    %165 = vmatprep.subr.bf16.mxu0 0
    %166 = vmatpush1.bf16.msra.mxu0 0
    %167 = vmatprep.subr.bf16.mxu0 0
    %168 = vmatpush1.bf16.msra.mxu0 0
    %169 = vmatprep.subr.bf16.mxu0 0
    %170 = vmatpush1.bf16.msra.mxu0 0
    %171 = vmatprep.subr.bf16.mxu0 0
    %172 = vmatpush1.bf16.msra.mxu0 0
    %173 = vmatprep.mubr.bf16.mxu0 0
    %174 = vmatmul.mubr.bf16.gmra.mrb[0].mxu0 %v139
    %v175 = vpop.f32.mrb[0].mxu0
    %v176 = vadd.f32 %v123, %v175
    %v177 = vpop.f32.mrb[0].mxu0
    %v178 = vpop.f32.mrb[0].mxu0
    %v179 = vpop.f32.mrb[0].mxu0
    %180 = vdwg.mxu0
    %v181 = vld [vmem:[%s4] sm:$0x1]
    %v182 = vld [vmem:[%s5] sm:$0x1]
    %183 = vadd.xlane.f32.xlu0 %v176
    %v184 = vpop.xlane.xlu0 %183
    %v185 = vmul.f32 %v184, 0.03125
    %v186 = vmul.f32 %v176, %v176
    %187 = vadd.xlane.f32.xlu0 %v186
    %v188 = vpop.xlane.xlu0 %187
    %v189 = vmul.f32 %v188, 0.03125
    %v190 = vmul.f32 %v185, %v185
    %v191 = vsub.f32 %v189, %v190
    %v192 = vmax.f32 %v191, 0.0
    %v193 = vsub.f32 %v176, %v185
    %v194 = vadd.f32 %v192, 1e-05
    %v195 = vrsqrt.pop %v194
    %v196 = vmul.f32 %v193, %v195
    %v198 = vlaneseq
    %v199 = vshrl.u32 %v198, 7
    %v200 = vsub.s32 0, %v199
    %v201 = vrot.slane %v181, %v200
    %v203 = vmul.f32 %v196, %v201
    %v205 = vlaneseq
    %v206 = vshrl.u32 %v205, 7
    %v207 = vsub.s32 0, %v206
    %v208 = vrot.slane %v182, %v207
    %v210 = vadd.f32 %v203, %v208
    %v211 = vmax.f32 %v210, 0.0
    %v212 = vld [vmem:[%s6] sm:$0x1]
    %v213 = vld [vmem:[%s7] sm:$0x1]
    %214 = vadd.xlane.f32.xlu0 %v211
    %v215 = vpop.xlane.xlu0 %214
    %v216 = vmul.f32 %v215, 0.03125
    %v217 = vmul.f32 %v211, %v211
    %218 = vadd.xlane.f32.xlu0 %v217
    %v219 = vpop.xlane.xlu0 %218
    %v220 = vmul.f32 %v219, 0.03125
    %v221 = vmul.f32 %v216, %v216
    %v222 = vsub.f32 %v220, %v221
    %v223 = vmax.f32 %v222, 0.0
    %v224 = vsub.f32 %v211, %v216
    %v225 = vadd.f32 %v223, 1e-05
    %v226 = vrsqrt.pop %v225
    %v227 = vmul.f32 %v224, %v226
    %v229 = vlaneseq
    %v230 = vshrl.u32 %v229, 7
    %v231 = vsub.s32 0, %v230
    %v232 = vrot.slane %v212, %v231
    %v234 = vmul.f32 %v227, %v232
    %v236 = vlaneseq
    %v237 = vshrl.u32 %v236, 7
    %v238 = vsub.s32 0, %v237
    %v239 = vrot.slane %v213, %v238
    %v241 = vadd.f32 %v234, %v239
    %v242 = vpack.c.bf16 %v241, %v241
    %v243 = vld [vmem:[#allocation7] sm:$0xf]
    %v244 = vld [vmem:[#allocation7 + $0x4] sm:$0xf]
    %v245 = vld [vmem:[#allocation7 + $0x8] sm:$0xf]
    %v246 = vld [vmem:[#allocation7 + $0xc] sm:$0xf]
    %v247 = vld [vmem:[#allocation7 + $0x10] sm:$0xf]
    %v248 = vld [vmem:[#allocation7 + $0x14] sm:$0xf]
    %v249 = vld [vmem:[#allocation7 + $0x18] sm:$0xf]
    %v250 = vld [vmem:[#allocation7 + $0x1c] sm:$0xf]
    %v251 = vld [vmem:[#allocation7 + $0x20] sm:$0xf]
    %v252 = vld [vmem:[#allocation7 + $0x24] sm:$0xf]
    %v253 = vld [vmem:[#allocation7 + $0x28] sm:$0xf]
    %v254 = vld [vmem:[#allocation7 + $0x2c] sm:$0xf]
    %v255 = vld [vmem:[#allocation7 + $0x30] sm:$0xf]
    %v256 = vld [vmem:[#allocation7 + $0x34] sm:$0xf]
    %v257 = vld [vmem:[#allocation7 + $0x38] sm:$0xf]
    %v258 = vld [vmem:[#allocation7 + $0x3c] sm:$0xf]
    %v259 = vld [vmem:[%s9] sm:$0x1]
    %v261 = vlaneseq
    %v262 = vshrl.u32 %v261, 7
    %v263 = vsub.s32 0, %v262
    %v264 = vrot.slane %v259, %v263
    %v282 = vunpack.c.l.b16 %v243
    %v283 = vunpack.c.l.b16 %v244
    %v284 = vunpack.c.l.b16 %v245
    %v285 = vunpack.c.l.b16 %v246
    %v286 = vunpack.c.l.b16 %v247
    %v287 = vunpack.c.l.b16 %v248
    %v288 = vunpack.c.l.b16 %v249
    %v289 = vunpack.c.l.b16 %v250
    %v290 = vunpack.c.l.b16 %v251
    %v291 = vunpack.c.l.b16 %v252
    %v292 = vunpack.c.l.b16 %v253
    %v293 = vunpack.c.l.b16 %v254
    %v294 = vunpack.c.l.b16 %v255
    %v295 = vunpack.c.l.b16 %v256
    %v296 = vunpack.c.l.b16 %v257
    %v297 = vunpack.c.l.b16 %v258
    %v298 = vpack.c.b16 %v283, %v282
    %v299 = vpack.c.b16 %v285, %v284
    %v300 = vpack.c.b16 %v287, %v286
    %v301 = vpack.c.b16 %v289, %v288
    %v302 = vpack.c.b16 %v291, %v290
    %v303 = vpack.c.b16 %v293, %v292
    %v304 = vpack.c.b16 %v295, %v294
    %v305 = vpack.c.b16 %v297, %v296
    %314 = vmatprep.subr.bf16.mxu0 0
    %315 = vmatpush1.bf16.msra.mxu0 %v298
    %316 = vmatprep.subr.bf16.mxu0 0
    %317 = vmatpush1.bf16.msra.mxu0 %v299
    %318 = vmatprep.subr.bf16.mxu0 0
    %319 = vmatpush1.bf16.msra.mxu0 %v300
    %320 = vmatprep.subr.bf16.mxu0 0
    %321 = vmatpush1.bf16.msra.mxu0 %v301
    %322 = vmatprep.subr.bf16.mxu0 0
    %323 = vmatpush1.bf16.msra.mxu0 %v302
    %324 = vmatprep.subr.bf16.mxu0 0
    %325 = vmatpush1.bf16.msra.mxu0 %v303
    %326 = vmatprep.subr.bf16.mxu0 0
    %327 = vmatpush1.bf16.msra.mxu0 %v304
    %328 = vmatprep.subr.bf16.mxu0 0
    %329 = vmatpush1.bf16.msra.mxu0 %v305
    %330 = vmatprep.subr.bf16.mxu0 0
    %331 = vmatpush1.bf16.msra.mxu0 0
    %332 = vmatprep.subr.bf16.mxu0 0
    %333 = vmatpush1.bf16.msra.mxu0 0
    %334 = vmatprep.subr.bf16.mxu0 0
    %335 = vmatpush1.bf16.msra.mxu0 0
    %336 = vmatprep.subr.bf16.mxu0 0
    %337 = vmatpush1.bf16.msra.mxu0 0
    %338 = vmatprep.subr.bf16.mxu0 0
    %339 = vmatpush1.bf16.msra.mxu0 0
    %340 = vmatprep.subr.bf16.mxu0 0
    %341 = vmatpush1.bf16.msra.mxu0 0
    %342 = vmatprep.subr.bf16.mxu0 0
    %343 = vmatpush1.bf16.msra.mxu0 0
    %344 = vmatprep.subr.bf16.mxu0 0
    %345 = vmatpush1.bf16.msra.mxu0 0
    %346 = vmatprep.mubr.bf16.mxu0 0
    %347 = vmatmul.mubr.bf16.gmra.mrb[0].mxu0 %v242
    %v348 = vpop.f32.mrb[0].mxu0
    %v349 = vadd.f32 %v264, %v348
    %v350 = vpop.f32.mrb[0].mxu0
    %v351 = vpop.f32.mrb[0].mxu0
    %v352 = vpop.f32.mrb[0].mxu0
    %353 = vdwg.mxu0
    %v354 = vld [vmem:[#allocation4] sm:$0xff]
    %v355 = vpack.c.bf16 %v354, %v354
    %v356 = vld [vmem:[%s10] sm:$0xf]
    %v357 = vld [vmem:[%s11] sm:$0x1]
    %v359 = vlaneseq
    %v360 = vshrl.u32 %v359, 7
    %v361 = vsub.s32 0, %v360
    %v362 = vrot.slane %v357, %v361
    %vm364 = vcmask 64512
    %v366 = vsel %vm364, %v355, 0
    %vm368 = vcmask 1043456
    %v370 = vsel %vm368, %v356, 0
    %372 = vmatprep.subr.bf16.mxu0 0
    %373 = vmatpush1.bf16.msra.mxu0 %v370
    %374 = vmatprep.subr.bf16.mxu0 0
    %375 = vmatpush1.bf16.msra.mxu0 0
    %376 = vmatprep.subr.bf16.mxu0 0
    %377 = vmatpush1.bf16.msra.mxu0 0
    %378 = vmatprep.subr.bf16.mxu0 0
    %379 = vmatpush1.bf16.msra.mxu0 0
    %380 = vmatprep.subr.bf16.mxu0 0
    %381 = vmatpush1.bf16.msra.mxu0 0
    %382 = vmatprep.subr.bf16.mxu0 0
    %383 = vmatpush1.bf16.msra.mxu0 0
    %384 = vmatprep.subr.bf16.mxu0 0
    %385 = vmatpush1.bf16.msra.mxu0 0
    %386 = vmatprep.subr.bf16.mxu0 0
    %387 = vmatpush1.bf16.msra.mxu0 0
    %388 = vmatprep.subr.bf16.mxu0 0
    %389 = vmatpush1.bf16.msra.mxu0 0
    %390 = vmatprep.subr.bf16.mxu0 0
    %391 = vmatpush1.bf16.msra.mxu0 0
    %392 = vmatprep.subr.bf16.mxu0 0
    %393 = vmatpush1.bf16.msra.mxu0 0
    %394 = vmatprep.subr.bf16.mxu0 0
    %395 = vmatpush1.bf16.msra.mxu0 0
    %396 = vmatprep.subr.bf16.mxu0 0
    %397 = vmatpush1.bf16.msra.mxu0 0
    %398 = vmatprep.subr.bf16.mxu0 0
    %399 = vmatpush1.bf16.msra.mxu0 0
    %400 = vmatprep.subr.bf16.mxu0 0
    %401 = vmatpush1.bf16.msra.mxu0 0
    %402 = vmatprep.subr.bf16.mxu0 0
    %403 = vmatpush1.bf16.msra.mxu0 0
    %404 = vmatprep.mubr.bf16.mxu0 0
    %405 = vmatmul.mubr.bf16.gmra.mrb[0].mxu0 %v366
    %v406 = vpop.f32.mrb[0].mxu0
    %v407 = vadd.f32 %v362, %v406
    %v408 = vpop.f32.mrb[0].mxu0
    %v409 = vpop.f32.mrb[0].mxu0
    %v410 = vpop.f32.mrb[0].mxu0
    %411 = vdwg.mxu0
    %v412 = vmax.f32 %v407, 0.0
    %v413 = vadd.f32 %v349, %v412
    %v414 = vmax.f32 %v413, 0.0
    %v415 = vpack.c.bf16 %v414, %v414
    %v416 = vld [vmem:[#allocation9] sm:$0xf]
    %v417 = vld [vmem:[#allocation9 + $0x4] sm:$0xf]
    %v418 = vld [vmem:[#allocation9 + $0x8] sm:$0xf]
    %v419 = vld [vmem:[#allocation9 + $0xc] sm:$0xf]
    %v420 = vld [vmem:[#allocation9 + $0x10] sm:$0xf]
    %v421 = vld [vmem:[#allocation9 + $0x14] sm:$0xf]
    %v422 = vld [vmem:[#allocation9 + $0x18] sm:$0xf]
    %v423 = vld [vmem:[#allocation9 + $0x1c] sm:$0xf]
    %v424 = vld [vmem:[#allocation9 + $0x20] sm:$0xf]
    %v425 = vld [vmem:[#allocation9 + $0x24] sm:$0xf]
    %v426 = vld [vmem:[#allocation9 + $0x28] sm:$0xf]
    %v427 = vld [vmem:[#allocation9 + $0x2c] sm:$0xf]
    %v428 = vld [vmem:[#allocation9 + $0x30] sm:$0xf]
    %v429 = vld [vmem:[#allocation9 + $0x34] sm:$0xf]
    %v430 = vld [vmem:[#allocation9 + $0x38] sm:$0xf]
    %v431 = vld [vmem:[#allocation9 + $0x3c] sm:$0xf]
    %v432 = vld [vmem:[%s13] sm:$0x1]
    %v434 = vlaneseq
    %v435 = vshrl.u32 %v434, 7
    %v436 = vsub.s32 0, %v435
    %v437 = vrot.slane %v432, %v436
    %v455 = vunpack.c.l.b16 %v416
    %v456 = vunpack.c.l.b16 %v417
    %v457 = vunpack.c.l.b16 %v418
    %v458 = vunpack.c.l.b16 %v419
    %v459 = vunpack.c.l.b16 %v420
    %v460 = vunpack.c.l.b16 %v421
    %v461 = vunpack.c.l.b16 %v422
    %v462 = vunpack.c.l.b16 %v423
    %v463 = vunpack.c.l.b16 %v424
    %v464 = vunpack.c.l.b16 %v425
    %v465 = vunpack.c.l.b16 %v426
    %v466 = vunpack.c.l.b16 %v427
    %v467 = vunpack.c.l.b16 %v428
    %v468 = vunpack.c.l.b16 %v429
    %v469 = vunpack.c.l.b16 %v430
    %v470 = vunpack.c.l.b16 %v431
    %v471 = vpack.c.b16 %v456, %v455
    %v472 = vpack.c.b16 %v458, %v457
    %v473 = vpack.c.b16 %v460, %v459
    %v474 = vpack.c.b16 %v462, %v461
    %v475 = vpack.c.b16 %v464, %v463
    %v476 = vpack.c.b16 %v466, %v465
    %v477 = vpack.c.b16 %v468, %v467
    %v478 = vpack.c.b16 %v470, %v469
    %487 = vmatprep.subr.bf16.mxu0 0
    %488 = vmatpush1.bf16.msra.mxu0 %v471
    %489 = vmatprep.subr.bf16.mxu0 0
    %490 = vmatpush1.bf16.msra.mxu0 %v472
    %491 = vmatprep.subr.bf16.mxu0 0
    %492 = vmatpush1.bf16.msra.mxu0 %v473
    %493 = vmatprep.subr.bf16.mxu0 0
    %494 = vmatpush1.bf16.msra.mxu0 %v474
    %495 = vmatprep.subr.bf16.mxu0 0
    %496 = vmatpush1.bf16.msra.mxu0 %v475
    %497 = vmatprep.subr.bf16.mxu0 0
    %498 = vmatpush1.bf16.msra.mxu0 %v476
    %499 = vmatprep.subr.bf16.mxu0 0
    %500 = vmatpush1.bf16.msra.mxu0 %v477
    %501 = vmatprep.subr.bf16.mxu0 0
    %502 = vmatpush1.bf16.msra.mxu0 %v478
    %503 = vmatprep.subr.bf16.mxu0 0
    %504 = vmatpush1.bf16.msra.mxu0 0
    %505 = vmatprep.subr.bf16.mxu0 0
    %506 = vmatpush1.bf16.msra.mxu0 0
    %507 = vmatprep.subr.bf16.mxu0 0
    %508 = vmatpush1.bf16.msra.mxu0 0
    %509 = vmatprep.subr.bf16.mxu0 0
    %510 = vmatpush1.bf16.msra.mxu0 0
    %511 = vmatprep.subr.bf16.mxu0 0
    %512 = vmatpush1.bf16.msra.mxu0 0
    %513 = vmatprep.subr.bf16.mxu0 0
    %514 = vmatpush1.bf16.msra.mxu0 0
    %515 = vmatprep.subr.bf16.mxu0 0
    %516 = vmatpush1.bf16.msra.mxu0 0
    %517 = vmatprep.subr.bf16.mxu0 0
    %518 = vmatpush1.bf16.msra.mxu0 0
    %519 = vmatprep.mubr.bf16.mxu0 0
    %520 = vmatmul.mubr.bf16.gmra.mrb[0].mxu0 %v415
    %v521 = vpop.f32.mrb[0].mxu0
    %v522 = vadd.f32 %v437, %v521
    %v523 = vpop.f32.mrb[0].mxu0
    %v524 = vpop.f32.mrb[0].mxu0
    %v525 = vpop.f32.mrb[0].mxu0
    %526 = vdwg.mxu0
    %vm527 = vcmask 7168
    %528 = vst.msk [vmem:[%s14] sm:$0xff] %vm527, %v522
    // Predicated region
    $region78: #{tpu_custom_call.1} parent=1 // pred_check
      _
    $region79: #{tpu_custom_call.1} parent=1 // pred_check_branch
      %530 = sbr.rel (0) target = $region81
    $region80: #{tpu_custom_call.1} parent=1 // pred_region
      _
    $region81: #{tpu_custom_call.1} parent=1 // pred_fallthru
      _
    // Predicated region
    $region82: #{tpu_custom_call.1} parent=1 // pred_check
      _
    $region83: #{tpu_custom_call.1} parent=1 // pred_check_branch
      %532 = sbr.rel (0) target = $region85
    $region84: #{tpu_custom_call.1} parent=1 // pred_region
      _
    $region85: #{tpu_custom_call.1} parent=1 // pred_fallthru
      _
    %533 = vsyncpa [#allocation3], 1
    %534 = vsyncpa [#allocation5], 1
    %535 = vsyncpa [#allocation8], 1

</llo_original>
